<compile_context>
chip_gen: v7x
topology: tpu7x:2x2x1
jax: 0.10.0
libtpu: 0.0.40
codegen_flags: <defaults>
</compile_context>

<pallas_src>
import math

import jax
import jax.numpy as jnp
from jax.experimental import pallas as pl
from jax.experimental.pallas import tpu as pltpu

D = 32        # d_model ("size")
H = 4         # attention heads
DK = D // H   # per-head dim
DFF = 64      # feed-forward hidden dim
EPS = 1e-6
NEG = -1e9


def _layernorm(v, g, b):
    # Matches the module's custom LayerNorm: mean/std over last dim, UNBIASED
    # std (N-1), eps added to the std (not the variance).
    mean = jnp.mean(v, axis=-1, keepdims=True)
    c = v - mean
    var = jnp.sum(c * c, axis=-1, keepdims=True) / (v.shape[-1] - 1)
    return g * c / (jnp.sqrt(var) + EPS) + b


def encoder_layer(x, src_lens, params, *, batch_block=None,
                  matmul_dtype=jnp.bfloat16):
    """Fused EncoderLayer forward.

    x:        (B, T, D) float32
    src_lens: (B,) int32 — valid key length per sequence (padding mask).
    """
    B, T, D_ = x.shape
    assert D_ == D
    BB = B if batch_block is None else batch_block
    assert B % BB == 0
    f32 = jnp.float32
    N = BB * T
    scale = 1.0 / math.sqrt(DK)

    # --- pack / cast parameters in the wrapper (tiny, one-off) -------------
    wqkv = jnp.concatenate([params["wq"], params["wk"], params["wv"]],
                           axis=1).astype(matmul_dtype)                 # (D, 3D)
    bqkv = jnp.concatenate([params["bq"], params["bk"], params["bv"]]
                           ).reshape(1, 3 * D).astype(f32)              # (1, 3D)
    wo = params["wo"].astype(matmul_dtype)
    bo = params["bo"].reshape(1, D).astype(f32)
    w1 = params["w1"].astype(matmul_dtype)
    b1 = params["b1"].reshape(1, DFF).astype(f32)
    w2 = params["w2"].astype(matmul_dtype)
    b2 = params["b2"].reshape(1, D).astype(f32)
    ln_g = params["ln_g"].astype(f32)                                    # (2, D)
    ln_b = params["ln_b"].astype(f32)                                    # (2, D)

    def kernel(lens_ref, x_ref, wqkv_ref, bqkv_ref, wo_ref, bo_ref,
               lng_ref, lnb_ref, w1_ref, b1_ref, w2_ref, b2_ref,
               out_ref, ctx_ref):
        b0 = pl.program_id(0) * BB

        xv = x_ref[...].reshape(N, D)                  # (N, D) f32
        x_mm = xv.astype(matmul_dtype)

        # Fused QKV projection: one (N, D) x (D, 3D) matmul, f32 accumulate.
        qkv = jnp.dot(x_mm, wqkv_ref[...],
                      preferred_element_type=jnp.float32) + bqkv_ref[...]
        qf = (qkv[:, 0:D] * scale).reshape(BB, T, D)   # fold 1/sqrt(dk) into q
        kf = qkv[:, D:2 * D].reshape(BB, T, D)
        vf = qkv[:, 2 * D:3 * D].reshape(BB, T, D)

        # Key-padding mask built in-kernel from prefetched lengths (no DMA).
        kidx = jax.lax.broadcasted_iota(jnp.int32, (BB, T, T), 2)
        bidx = jax.lax.broadcasted_iota(jnp.int32, (BB, T, T), 0)
        lens_full = jnp.zeros((BB, T, T), jnp.int32)
        for i in range(BB):
            lens_full = jnp.where(bidx == i, lens_ref[b0 + i], lens_full)
        keep = kidx < lens_full                        # (BB, T, T) bool

        # Multi-head attention: heads statically unrolled, batch handled by a
        # single-batch-dim einsum; head outputs go straight into a VMEM slab
        # (no lane-axis concatenation / relayouts).
        for h in range(H):
            sl = slice(h * DK, (h + 1) * DK)
            qh = qf[:, :, sl].astype(matmul_dtype)
            kh = kf[:, :, sl].astype(matmul_dtype)
            vh = vf[:, :, sl].astype(matmul_dtype)
            s = jnp.einsum("btd,bsd->bts", qh, kh,
                           preferred_element_type=jnp.float32)   # (BB, T, T)
            s = jnp.where(keep, s, NEG)
            m = jnp.max(s, axis=-1, keepdims=True)
            e = jnp.exp(s - m)
            p = e * pl.reciprocal(jnp.sum(e, axis=-1, keepdims=True),
                                  approx=True)
            ctx = jnp.einsum("bts,bsd->btd", p.astype(matmul_dtype), vh,
                             preferred_element_type=jnp.float32)  # (BB, T, DK)
            ctx_ref[:, sl] = ctx.reshape(N, DK)

        attn = jnp.dot(ctx_ref[...].astype(matmul_dtype), wo_ref[...],
                       preferred_element_type=jnp.float32) + bo_ref[...]

        # SubLayerConnection 0: x + LN(self_attn(x))   (dropout = identity)
        y = xv + _layernorm(attn, lng_ref[0:1, :], lnb_ref[0:1, :])

        # Position-wise feed-forward: Linear -> ReLU -> Linear.
        h1 = jnp.maximum(
            jnp.dot(y.astype(matmul_dtype), w1_ref[...],
                    preferred_element_type=jnp.float32) + b1_ref[...], 0.0)
        ff = jnp.dot(h1.astype(matmul_dtype), w2_ref[...],
                     preferred_element_type=jnp.float32) + b2_ref[...]

        # SubLayerConnection 1: x + LN(feed_forward(x))
        y = y + _layernorm(ff, lng_ref[1:2, :], lnb_ref[1:2, :])

        out_ref[...] = y.reshape(BB, T, D)

    grid_spec = pltpu.PrefetchScalarGridSpec(
        num_scalar_prefetch=1,            # src_lens -> SMEM, read in-kernel
        grid=(B // BB,),
        in_specs=[
            pl.BlockSpec((BB, T, D), lambda b, lens: (b, 0, 0)),   # x
            pl.BlockSpec((D, 3 * D), lambda b, lens: (0, 0)),      # Wqkv
            pl.BlockSpec((1, 3 * D), lambda b, lens: (0, 0)),      # bqkv
            pl.BlockSpec((D, D), lambda b, lens: (0, 0)),          # Wo
            pl.BlockSpec((1, D), lambda b, lens: (0, 0)),          # bo
            pl.BlockSpec((2, D), lambda b, lens: (0, 0)),          # LN gammas
            pl.BlockSpec((2, D), lambda b, lens: (0, 0)),          # LN betas
            pl.BlockSpec((D, DFF), lambda b, lens: (0, 0)),        # W1
            pl.BlockSpec((1, DFF), lambda b, lens: (0, 0)),        # b1
            pl.BlockSpec((DFF, D), lambda b, lens: (0, 0)),        # W2
            pl.BlockSpec((1, D), lambda b, lens: (0, 0)),          # b2
        ],
        out_specs=pl.BlockSpec((BB, T, D), lambda b, lens: (b, 0, 0)),
        scratch_shapes=[pltpu.VMEM((N, D), jnp.float32)],          # head slab
    )

    return pl.pallas_call(
        kernel,
        out_shape=jax.ShapeDtypeStruct((B, T, D), jnp.float32),
        grid_spec=grid_spec,
        compiler_params=pltpu.CompilerParams(
            dimension_semantics=("parallel",)),
    )(src_lens.astype(jnp.int32), x.astype(f32),
      wqkv, bqkv, wo, bo, ln_g, ln_b, w1, b1, w2, b2)


def reference(x, src_lens, params, matmul_dtype=jnp.bfloat16):
    """Pure-JAX EncoderLayer forward.  Mirrors the kernel's matmul-operand
    precision (bf16 operands, f32 accumulation) so the check isolates kernel
    structure; with matmul_dtype=float32 it is the exact f32 module math."""
    B, T, _ = x.shape
    mm = matmul_dtype
    f32 = jnp.float32
    scale = 1.0 / math.sqrt(DK)

    def linear(a, w, bias):
        return jnp.einsum("btd,de->bte", a.astype(mm), w.astype(mm),
                          preferred_element_type=f32) + bias

    q = linear(x, params["wq"], params["bq"]) * scale
    k = linear(x, params["wk"], params["bk"])
    v = linear(x, params["wv"], params["bv"])
    q = q.reshape(B, T, H, DK)
    k = k.reshape(B, T, H, DK)
    v = v.reshape(B, T, H, DK)
    s = jnp.einsum("bqhd,bkhd->bhqk", q.astype(mm), k.astype(mm),
                   preferred_element_type=f32)
    keep = jnp.arange(T)[None, None, None, :] < src_lens[:, None, None, None]
    s = jnp.where(keep, s, NEG)
    p = jax.nn.softmax(s, axis=-1)
    ctx = jnp.einsum("bhqk,bkhd->bqhd", p.astype(mm), v.astype(mm),
                     preferred_element_type=f32).reshape(B, T, D)
    attn = linear(ctx, params["wo"], params["bo"])
    y = x + _layernorm(attn, params["ln_g"][0:1], params["ln_b"][0:1])
    h1 = jnp.maximum(linear(y, params["w1"], params["b1"]), 0.0)
    ff = linear(h1, params["w2"], params["b2"])
    return y + _layernorm(ff, params["ln_g"][1:2], params["ln_b"][1:2])


if __name__ == "__main__":
    B, T = 2, 8
    key = jax.random.PRNGKey(0)
    ks = jax.random.split(key, 15)

    x = jax.random.normal(ks[0], (B, T, D), dtype=jnp.float32)
    # Per-sequence valid lengths (standard encoder key-padding mask):
    # batch 0 is full, batch 1 has its last 3 positions padded.
    src_lens = jnp.array([T, T - 3], dtype=jnp.int32)

    def w(k, shape, s=0.08):
        return s * jax.random.normal(k, shape, dtype=jnp.float32)

    params = {
        "wq": w(ks[1], (D, D)), "bq": w(ks[2], (D,), 0.02),
        "wk": w(ks[3], (D, D)), "bk": w(ks[4], (D,), 0.02),
        "wv": w(ks[5], (D, D)), "bv": w(ks[6], (D,), 0.02),
        "wo": w(ks[7], (D, D)), "bo": w(ks[8], (D,), 0.02),
        "ln_g": 1.0 + w(ks[9], (2, D), 0.05),
        "ln_b": w(ks[10], (2, D), 0.05),
        "w1": w(ks[11], (D, DFF)), "b1": w(ks[12], (DFF,), 0.02),
        "w2": w(ks[13], (DFF, D)), "b2": w(ks[14], (D,), 0.02),
    }

    # f32-matmul path: validates exact module semantics (tolerance only covers
    # the approximate EUP reciprocal in the softmax and MXU accumulation order).
    out32 = jax.block_until_ready(
        encoder_layer(x, src_lens, params, matmul_dtype=jnp.float32))
    ref32 = reference(x, src_lens, params, matmul_dtype=jnp.float32)
    assert out32.shape == (B, T, D)
    assert jnp.allclose(out32, ref32, atol=1e-2, rtol=1e-2), "f32 mismatch"

    # bf16-matmul path (perf-recommended operand dtype on v5e/v6e/v7x MXU).
    out16 = jax.block_until_ready(encoder_layer(x, src_lens, params))
    ref16 = reference(x, src_lens, params)
    assert out16.shape == (B, T, D)
    assert jnp.allclose(out16, ref16, atol=2e-2, rtol=2e-2), "bf16 mismatch"

    print("KERNEL_OK")
</pallas_src>

<mosaic_0001>
module attributes {stable_mosaic.version = 11 : i64} {
  func.func @kernel(%arg0: i32, %arg1: memref<2xi32, #tpu.memory_space<smem>>, %arg2: memref<2x8x32xf32, #tpu.memory_space<vmem>>, %arg3: memref<32x96xf32, #tpu.memory_space<vmem>>, %arg4: memref<1x96xf32, #tpu.memory_space<vmem>>, %arg5: memref<32x32xf32, #tpu.memory_space<vmem>>, %arg6: memref<1x32xf32, #tpu.memory_space<vmem>>, %arg7: memref<2x32xf32, #tpu.memory_space<vmem>>, %arg8: memref<2x32xf32, #tpu.memory_space<vmem>>, %arg9: memref<32x64xf32, #tpu.memory_space<vmem>>, %arg10: memref<1x64xf32, #tpu.memory_space<vmem>>, %arg11: memref<64x32xf32, #tpu.memory_space<vmem>>, %arg12: memref<1x32xf32, #tpu.memory_space<vmem>>, %arg13: memref<2x8x32xf32, #tpu.memory_space<vmem>>, %arg14: memref<16x32xf32, #tpu.memory_space<vmem>>) attributes {dimension_semantics = [#tpu.dimension_semantics<parallel>], iteration_bounds = array<i64: 1>, scalar_prefetch = 1 : i64, scratch_operands = 1 : i64, tpu.core_type = #tpu.core_type<tc>, window_params = [{transform_indices = @transform_0, window_bounds = array<i64: 2, 8, 32>}, {pipeline_mode = #tpu.pipeline_mode<synchronous>, transform_indices = @transform_1, window_bounds = array<i64: 32, 96>}, {pipeline_mode = #tpu.pipeline_mode<synchronous>, transform_indices = @transform_2, window_bounds = array<i64: 1, 96>}, {pipeline_mode = #tpu.pipeline_mode<synchronous>, transform_indices = @transform_3, window_bounds = array<i64: 32, 32>}, {pipeline_mode = #tpu.pipeline_mode<synchronous>, transform_indices = @transform_4, window_bounds = array<i64: 1, 32>}, {pipeline_mode = #tpu.pipeline_mode<synchronous>, transform_indices = @transform_5, window_bounds = array<i64: 2, 32>}, {pipeline_mode = #tpu.pipeline_mode<synchronous>, transform_indices = @transform_6, window_bounds = array<i64: 2, 32>}, {pipeline_mode = #tpu.pipeline_mode<synchronous>, transform_indices = @transform_7, window_bounds = array<i64: 32, 64>}, {pipeline_mode = #tpu.pipeline_mode<synchronous>, transform_indices = @transform_8, window_bounds = array<i64: 1, 64>}, {pipeline_mode = #tpu.pipeline_mode<synchronous>, transform_indices = @transform_9, window_bounds = array<i64: 64, 32>}, {pipeline_mode = #tpu.pipeline_mode<synchronous>, transform_indices = @transform_10, window_bounds = array<i64: 1, 32>}, {transform_indices = @transform_11, window_bounds = array<i64: 2, 8, 32>}]} {
    %c2_i32 = arith.constant 2 : i32
    %0 = arith.muli %arg0, %c2_i32 : i32
    %c0 = arith.constant 0 : index
    %c0_0 = arith.constant 0 : index
    %c0_1 = arith.constant 0 : index
    %1 = vector.load %arg2[%c0, %c0_0, %c0_1] : memref<2x8x32xf32, #tpu.memory_space<vmem>>, vector<2x8x32xf32>
    %2 = vector.shape_cast %1 : vector<2x8x32xf32> to vector<16x32xf32>
    %c0_2 = arith.constant 0 : index
    %c0_3 = arith.constant 0 : index
    %3 = vector.load %arg3[%c0_2, %c0_3] : memref<32x96xf32, #tpu.memory_space<vmem>>, vector<32x96xf32>
    %cst = arith.constant dense<0.000000e+00> : vector<16x96xf32>
    %4 = tpu.matmul %2, %3, %cst {dimension_numbers = #tpu.dot_dimension_numbers<[1], [0], [0], [1], [0, 0, 1, 1], [], []>} : vector<16x32xf32>, vector<32x96xf32>, vector<16x96xf32> -> vector<16x96xf32>
    %c0_4 = arith.constant 0 : index
    %c0_5 = arith.constant 0 : index
    %5 = vector.load %arg4[%c0_4, %c0_5] : memref<1x96xf32, #tpu.memory_space<vmem>>, vector<1x96xf32>
    %6 = vector.broadcast %5 : vector<1x96xf32> to vector<16x96xf32>
    %7 = arith.addf %4, %6 : vector<16x96xf32>
    %8 = vector.extract_strided_slice %7 {offsets = [0, 0], sizes = [16, 32], strides = [1, 1]} : vector<16x96xf32> to vector<16x32xf32>
    %cst_6 = arith.constant 0.353553385 : f32
    %9 = vector.broadcast %cst_6 : f32 to vector<16x32xf32>
    %10 = arith.mulf %8, %9 : vector<16x32xf32>
    %11 = vector.shape_cast %10 : vector<16x32xf32> to vector<2x8x32xf32>
    %12 = vector.extract_strided_slice %7 {offsets = [0, 32], sizes = [16, 32], strides = [1, 1]} : vector<16x96xf32> to vector<16x32xf32>
    %13 = vector.shape_cast %12 : vector<16x32xf32> to vector<2x8x32xf32>
    %14 = vector.extract_strided_slice %7 {offsets = [0, 64], sizes = [16, 32], strides = [1, 1]} : vector<16x96xf32> to vector<16x32xf32>
    %15 = vector.shape_cast %14 : vector<16x32xf32> to vector<2x8x32xf32>
    %16 = tpu.iota {dimensions = array<i32: 2>} : vector<2x8x8xi32>
    %17 = tpu.iota {dimensions = array<i32: 0>} : vector<2x8x8xi32>
    %c0_i32 = arith.constant 0 : i32
    %18 = vector.broadcast %c0_i32 : i32 to vector<2x8x8xi32>
    %c0_i32_7 = arith.constant 0 : i32
    %19 = vector.broadcast %c0_i32_7 : i32 to vector<2x8x8xi32>
    %20 = arith.cmpi eq, %17, %19 : vector<2x8x8xi32>
    %c0_i32_8 = arith.constant 0 : i32
    %21 = arith.addi %0, %c0_i32_8 : i32
    %22 = arith.index_cast %21 : i32 to index
    %23 = memref.load %arg1[%22] : memref<2xi32, #tpu.memory_space<smem>>
    %24 = vector.broadcast %23 : i32 to vector<2x8x8xi32>
    %25 = arith.select %20, %24, %18 : vector<2x8x8xi1>, vector<2x8x8xi32>
    %c1_i32 = arith.constant 1 : i32
    %26 = vector.broadcast %c1_i32 : i32 to vector<2x8x8xi32>
    %27 = arith.cmpi eq, %17, %26 : vector<2x8x8xi32>
    %c1_i32_9 = arith.constant 1 : i32
    %28 = arith.addi %0, %c1_i32_9 : i32
    %29 = arith.index_cast %28 : i32 to index
    %30 = memref.load %arg1[%29] : memref<2xi32, #tpu.memory_space<smem>>
    %31 = vector.broadcast %30 : i32 to vector<2x8x8xi32>
    %32 = arith.select %27, %31, %25 : vector<2x8x8xi1>, vector<2x8x8xi32>
    %33 = arith.cmpi slt, %16, %32 : vector<2x8x8xi32>
    %34 = vector.extract_strided_slice %11 {offsets = [0, 0, 0], sizes = [2, 8, 8], strides = [1, 1, 1]} : vector<2x8x32xf32> to vector<2x8x8xf32>
    %35 = vector.extract_strided_slice %13 {offsets = [0, 0, 0], sizes = [2, 8, 8], strides = [1, 1, 1]} : vector<2x8x32xf32> to vector<2x8x8xf32>
    %36 = vector.extract_strided_slice %15 {offsets = [0, 0, 0], sizes = [2, 8, 8], strides = [1, 1, 1]} : vector<2x8x32xf32> to vector<2x8x8xf32>
    "tpu.trace_start"() <{level = 10 : i32, message = "btd,bsd->bts"}> : () -> ()
    %cst_10 = arith.constant dense<0.000000e+00> : vector<2x8x8xf32>
    %37 = tpu.matmul %34, %35, %cst_10 {dimension_numbers = #tpu.dot_dimension_numbers<[2], [2], [1], [1], [0, 0, 0, 1, 1, 1], [0], [0]>} : vector<2x8x8xf32>, vector<2x8x8xf32>, vector<2x8x8xf32> -> vector<2x8x8xf32>
    %cst_11 = arith.constant -1.000000e+09 : f32
    "tpu.trace_stop"() : () -> ()
    %38 = vector.broadcast %cst_11 : f32 to vector<2x8x8xf32>
    %39 = arith.select %33, %37, %38 : vector<2x8x8xi1>, vector<2x8x8xf32>
    %cst_12 = arith.constant dense<0xFF800000> : vector<2x8xf32>
    %40 = vector.multi_reduction <maximumf>, %39, %cst_12 [2] : vector<2x8x8xf32> to vector<2x8xf32>
    %41 = vector.shape_cast %40 : vector<2x8xf32> to vector<2x8x1xf32>
    %42 = vector.broadcast %41 : vector<2x8x1xf32> to vector<2x8x8xf32>
    %43 = arith.subf %39, %42 : vector<2x8x8xf32>
    %44 = math.exp %43 : vector<2x8x8xf32>
    %cst_13 = arith.constant dense<0.000000e+00> : vector<2x8xf32>
    %45 = vector.multi_reduction <add>, %44, %cst_13 [2] : vector<2x8x8xf32> to vector<2x8xf32>
    %46 = vector.shape_cast %45 : vector<2x8xf32> to vector<2x8x1xf32>
    %47 = tpu.reciprocal %46 {approx = true} : vector<2x8x1xf32> -> vector<2x8x1xf32>
    %48 = vector.broadcast %47 : vector<2x8x1xf32> to vector<2x8x8xf32>
    %49 = arith.mulf %44, %48 : vector<2x8x8xf32>
    "tpu.trace_start"() <{level = 10 : i32, message = "bts,bsd->btd"}> : () -> ()
    %cst_14 = arith.constant dense<0.000000e+00> : vector<2x8x8xf32>
    %50 = tpu.matmul %49, %36, %cst_14 {dimension_numbers = #tpu.dot_dimension_numbers<[2], [1], [1], [2], [0, 0, 0, 1, 1, 2], [0], [0]>} : vector<2x8x8xf32>, vector<2x8x8xf32>, vector<2x8x8xf32> -> vector<2x8x8xf32>
    "tpu.trace_stop"() : () -> ()
    %51 = vector.shape_cast %50 : vector<2x8x8xf32> to vector<16x8xf32>
    %c0_15 = arith.constant 0 : index
    %c0_16 = arith.constant 0 : index
    %52 = vector.load %arg14[%c0_15, %c0_16] : memref<16x32xf32, #tpu.memory_space<vmem>>, vector<16x8xf32>
    tpu.vector_store %arg14[%c0_15, %c0_16], %51 {strides = array<i32>} : memref<16x32xf32, #tpu.memory_space<vmem>>, vector<16x8xf32>,
    %53 = vector.extract_strided_slice %11 {offsets = [0, 0, 8], sizes = [2, 8, 8], strides = [1, 1, 1]} : vector<2x8x32xf32> to vector<2x8x8xf32>
    %54 = vector.extract_strided_slice %13 {offsets = [0, 0, 8], sizes = [2, 8, 8], strides = [1, 1, 1]} : vector<2x8x32xf32> to vector<2x8x8xf32>
    %55 = vector.extract_strided_slice %15 {offsets = [0, 0, 8], sizes = [2, 8, 8], strides = [1, 1, 1]} : vector<2x8x32xf32> to vector<2x8x8xf32>
    "tpu.trace_start"() <{level = 10 : i32, message = "btd,bsd->bts"}> : () -> ()
    %cst_17 = arith.constant dense<0.000000e+00> : vector<2x8x8xf32>
    %56 = tpu.matmul %53, %54, %cst_17 {dimension_numbers = #tpu.dot_dimension_numbers<[2], [2], [1], [1], [0, 0, 0, 1, 1, 1], [0], [0]>} : vector<2x8x8xf32>, vector<2x8x8xf32>, vector<2x8x8xf32> -> vector<2x8x8xf32>
    %cst_18 = arith.constant -1.000000e+09 : f32
    "tpu.trace_stop"() : () -> ()
    %57 = vector.broadcast %cst_18 : f32 to vector<2x8x8xf32>
    %58 = arith.select %33, %56, %57 : vector<2x8x8xi1>, vector<2x8x8xf32>
    %cst_19 = arith.constant dense<0xFF800000> : vector<2x8xf32>
    %59 = vector.multi_reduction <maximumf>, %58, %cst_19 [2] : vector<2x8x8xf32> to vector<2x8xf32>
    %60 = vector.shape_cast %59 : vector<2x8xf32> to vector<2x8x1xf32>
    %61 = vector.broadcast %60 : vector<2x8x1xf32> to vector<2x8x8xf32>
    %62 = arith.subf %58, %61 : vector<2x8x8xf32>
    %63 = math.exp %62 : vector<2x8x8xf32>
    %cst_20 = arith.constant dense<0.000000e+00> : vector<2x8xf32>
    %64 = vector.multi_reduction <add>, %63, %cst_20 [2] : vector<2x8x8xf32> to vector<2x8xf32>
    %65 = vector.shape_cast %64 : vector<2x8xf32> to vector<2x8x1xf32>
    %66 = tpu.reciprocal %65 {approx = true} : vector<2x8x1xf32> -> vector<2x8x1xf32>
    %67 = vector.broadcast %66 : vector<2x8x1xf32> to vector<2x8x8xf32>
    %68 = arith.mulf %63, %67 : vector<2x8x8xf32>
    "tpu.trace_start"() <{level = 10 : i32, message = "bts,bsd->btd"}> : () -> ()
    %cst_21 = arith.constant dense<0.000000e+00> : vector<2x8x8xf32>
    %69 = tpu.matmul %68, %55, %cst_21 {dimension_numbers = #tpu.dot_dimension_numbers<[2], [1], [1], [2], [0, 0, 0, 1, 1, 2], [0], [0]>} : vector<2x8x8xf32>, vector<2x8x8xf32>, vector<2x8x8xf32> -> vector<2x8x8xf32>
    "tpu.trace_stop"() : () -> ()
    %70 = vector.shape_cast %69 : vector<2x8x8xf32> to vector<16x8xf32>
    %c0_22 = arith.constant 0 : index
    %c8 = arith.constant 8 : index
    %71 = vector.load %arg14[%c0_22, %c8] : memref<16x32xf32, #tpu.memory_space<vmem>>, vector<16x8xf32>
    tpu.vector_store %arg14[%c0_22, %c8], %70 {strides = array<i32>} : memref<16x32xf32, #tpu.memory_space<vmem>>, vector<16x8xf32>,
    %72 = vector.extract_strided_slice %11 {offsets = [0, 0, 16], sizes = [2, 8, 8], strides = [1, 1, 1]} : vector<2x8x32xf32> to vector<2x8x8xf32>
    %73 = vector.extract_strided_slice %13 {offsets = [0, 0, 16], sizes = [2, 8, 8], strides = [1, 1, 1]} : vector<2x8x32xf32> to vector<2x8x8xf32>
    %74 = vector.extract_strided_slice %15 {offsets = [0, 0, 16], sizes = [2, 8, 8], strides = [1, 1, 1]} : vector<2x8x32xf32> to vector<2x8x8xf32>
    "tpu.trace_start"() <{level = 10 : i32, message = "btd,bsd->bts"}> : () -> ()
    %cst_23 = arith.constant dense<0.000000e+00> : vector<2x8x8xf32>
    %75 = tpu.matmul %72, %73, %cst_23 {dimension_numbers = #tpu.dot_dimension_numbers<[2], [2], [1], [1], [0, 0, 0, 1, 1, 1], [0], [0]>} : vector<2x8x8xf32>, vector<2x8x8xf32>, vector<2x8x8xf32> -> vector<2x8x8xf32>
    %cst_24 = arith.constant -1.000000e+09 : f32
    "tpu.trace_stop"() : () -> ()
    %76 = vector.broadcast %cst_24 : f32 to vector<2x8x8xf32>
    %77 = arith.select %33, %75, %76 : vector<2x8x8xi1>, vector<2x8x8xf32>
    %cst_25 = arith.constant dense<0xFF800000> : vector<2x8xf32>
    %78 = vector.multi_reduction <maximumf>, %77, %cst_25 [2] : vector<2x8x8xf32> to vector<2x8xf32>
    %79 = vector.shape_cast %78 : vector<2x8xf32> to vector<2x8x1xf32>
    %80 = vector.broadcast %79 : vector<2x8x1xf32> to vector<2x8x8xf32>
    %81 = arith.subf %77, %80 : vector<2x8x8xf32>
    %82 = math.exp %81 : vector<2x8x8xf32>
    %cst_26 = arith.constant dense<0.000000e+00> : vector<2x8xf32>
    %83 = vector.multi_reduction <add>, %82, %cst_26 [2] : vector<2x8x8xf32> to vector<2x8xf32>
    %84 = vector.shape_cast %83 : vector<2x8xf32> to vector<2x8x1xf32>
    %85 = tpu.reciprocal %84 {approx = true} : vector<2x8x1xf32> -> vector<2x8x1xf32>
    %86 = vector.broadcast %85 : vector<2x8x1xf32> to vector<2x8x8xf32>
    %87 = arith.mulf %82, %86 : vector<2x8x8xf32>
    "tpu.trace_start"() <{level = 10 : i32, message = "bts,bsd->btd"}> : () -> ()
    %cst_27 = arith.constant dense<0.000000e+00> : vector<2x8x8xf32>
    %88 = tpu.matmul %87, %74, %cst_27 {dimension_numbers = #tpu.dot_dimension_numbers<[2], [1], [1], [2], [0, 0, 0, 1, 1, 2], [0], [0]>} : vector<2x8x8xf32>, vector<2x8x8xf32>, vector<2x8x8xf32> -> vector<2x8x8xf32>
    "tpu.trace_stop"() : () -> ()
    %89 = vector.shape_cast %88 : vector<2x8x8xf32> to vector<16x8xf32>
    %c0_28 = arith.constant 0 : index
    %c16 = arith.constant 16 : index
    %90 = vector.load %arg14[%c0_28, %c16] : memref<16x32xf32, #tpu.memory_space<vmem>>, vector<16x8xf32>
    tpu.vector_store %arg14[%c0_28, %c16], %89 {strides = array<i32>} : memref<16x32xf32, #tpu.memory_space<vmem>>, vector<16x8xf32>,
    %91 = vector.extract_strided_slice %11 {offsets = [0, 0, 24], sizes = [2, 8, 8], strides = [1, 1, 1]} : vector<2x8x32xf32> to vector<2x8x8xf32>
    %92 = vector.extract_strided_slice %13 {offsets = [0, 0, 24], sizes = [2, 8, 8], strides = [1, 1, 1]} : vector<2x8x32xf32> to vector<2x8x8xf32>
    %93 = vector.extract_strided_slice %15 {offsets = [0, 0, 24], sizes = [2, 8, 8], strides = [1, 1, 1]} : vector<2x8x32xf32> to vector<2x8x8xf32>
    "tpu.trace_start"() <{level = 10 : i32, message = "btd,bsd->bts"}> : () -> ()
    %cst_29 = arith.constant dense<0.000000e+00> : vector<2x8x8xf32>
    %94 = tpu.matmul %91, %92, %cst_29 {dimension_numbers = #tpu.dot_dimension_numbers<[2], [2], [1], [1], [0, 0, 0, 1, 1, 1], [0], [0]>} : vector<2x8x8xf32>, vector<2x8x8xf32>, vector<2x8x8xf32> -> vector<2x8x8xf32>
    %cst_30 = arith.constant -1.000000e+09 : f32
    "tpu.trace_stop"() : () -> ()
    %95 = vector.broadcast %cst_30 : f32 to vector<2x8x8xf32>
    %96 = arith.select %33, %94, %95 : vector<2x8x8xi1>, vector<2x8x8xf32>
    %cst_31 = arith.constant dense<0xFF800000> : vector<2x8xf32>
    %97 = vector.multi_reduction <maximumf>, %96, %cst_31 [2] : vector<2x8x8xf32> to vector<2x8xf32>
    %98 = vector.shape_cast %97 : vector<2x8xf32> to vector<2x8x1xf32>
    %99 = vector.broadcast %98 : vector<2x8x1xf32> to vector<2x8x8xf32>
    %100 = arith.subf %96, %99 : vector<2x8x8xf32>
    %101 = math.exp %100 : vector<2x8x8xf32>
    %cst_32 = arith.constant dense<0.000000e+00> : vector<2x8xf32>
    %102 = vector.multi_reduction <add>, %101, %cst_32 [2] : vector<2x8x8xf32> to vector<2x8xf32>
    %103 = vector.shape_cast %102 : vector<2x8xf32> to vector<2x8x1xf32>
    %104 = tpu.reciprocal %103 {approx = true} : vector<2x8x1xf32> -> vector<2x8x1xf32>
    %105 = vector.broadcast %104 : vector<2x8x1xf32> to vector<2x8x8xf32>
    %106 = arith.mulf %101, %105 : vector<2x8x8xf32>
    "tpu.trace_start"() <{level = 10 : i32, message = "bts,bsd->btd"}> : () -> ()
    %cst_33 = arith.constant dense<0.000000e+00> : vector<2x8x8xf32>
    %107 = tpu.matmul %106, %93, %cst_33 {dimension_numbers = #tpu.dot_dimension_numbers<[2], [1], [1], [2], [0, 0, 0, 1, 1, 2], [0], [0]>} : vector<2x8x8xf32>, vector<2x8x8xf32>, vector<2x8x8xf32> -> vector<2x8x8xf32>
    "tpu.trace_stop"() : () -> ()
    %108 = vector.shape_cast %107 : vector<2x8x8xf32> to vector<16x8xf32>
    %c0_34 = arith.constant 0 : index
    %c24 = arith.constant 24 : index
    %109 = vector.load %arg14[%c0_34, %c24] : memref<16x32xf32, #tpu.memory_space<vmem>>, vector<16x8xf32>
    tpu.vector_store %arg14[%c0_34, %c24], %108 {strides = array<i32>} : memref<16x32xf32, #tpu.memory_space<vmem>>, vector<16x8xf32>,
    %c0_35 = arith.constant 0 : index
    %c0_36 = arith.constant 0 : index
    %110 = vector.load %arg14[%c0_35, %c0_36] : memref<16x32xf32, #tpu.memory_space<vmem>>, vector<16x32xf32>
    %c0_37 = arith.constant 0 : index
    %c0_38 = arith.constant 0 : index
    %111 = vector.load %arg5[%c0_37, %c0_38] : memref<32x32xf32, #tpu.memory_space<vmem>>, vector<32x32xf32>
    %cst_39 = arith.constant dense<0.000000e+00> : vector<16x32xf32>
    %112 = tpu.matmul %110, %111, %cst_39 {dimension_numbers = #tpu.dot_dimension_numbers<[1], [0], [0], [1], [0, 0, 1, 1], [], []>} : vector<16x32xf32>, vector<32x32xf32>, vector<16x32xf32> -> vector<16x32xf32>
    %c0_40 = arith.constant 0 : index
    %c0_41 = arith.constant 0 : index
    %113 = vector.load %arg6[%c0_40, %c0_41] : memref<1x32xf32, #tpu.memory_space<vmem>>, vector<1x32xf32>
    %114 = vector.broadcast %113 : vector<1x32xf32> to vector<16x32xf32>
    %115 = arith.addf %112, %114 : vector<16x32xf32>
    %c0_42 = arith.constant 0 : index
    %c0_43 = arith.constant 0 : index
    %116 = vector.load %arg7[%c0_42, %c0_43] : memref<2x32xf32, #tpu.memory_space<vmem>>, vector<1x32xf32>
    %c0_44 = arith.constant 0 : index
    %c0_45 = arith.constant 0 : index
    %117 = vector.load %arg8[%c0_44, %c0_45] : memref<2x32xf32, #tpu.memory_space<vmem>>, vector<1x32xf32>
    %cst_46 = arith.constant dense<0.000000e+00> : vector<16xf32>
    %118 = vector.multi_reduction <add>, %115, %cst_46 [1] : vector<16x32xf32> to vector<16xf32>
    %119 = vector.shape_cast %118 : vector<16xf32> to vector<16x1xf32>
    %cst_47 = arith.constant 3.200000e+01 : f32
    %120 = vector.broadcast %cst_47 : f32 to vector<16x1xf32>
    %121 = arith.divf %119, %120 : vector<16x1xf32>
    %122 = vector.broadcast %121 : vector<16x1xf32> to vector<16x32xf32>
    %123 = arith.subf %115, %122 : vector<16x32xf32>
    %124 = arith.mulf %123, %123 : vector<16x32xf32>
    %cst_48 = arith.constant dense<0.000000e+00> : vector<16xf32>
    %125 = vector.multi_reduction <add>, %124, %cst_48 [1] : vector<16x32xf32> to vector<16xf32>
    %126 = vector.shape_cast %125 : vector<16xf32> to vector<16x1xf32>
    %cst_49 = arith.constant 3.100000e+01 : f32
    %127 = vector.broadcast %cst_49 : f32 to vector<16x1xf32>
    %128 = arith.divf %126, %127 : vector<16x1xf32>
    %129 = vector.broadcast %116 : vector<1x32xf32> to vector<16x32xf32>
    %130 = arith.mulf %129, %123 : vector<16x32xf32>
    %131 = math.sqrt %128 : vector<16x1xf32>
    %cst_50 = arith.constant 9.99999997E-7 : f32
    %132 = vector.broadcast %cst_50 : f32 to vector<16x1xf32>
    %133 = arith.addf %131, %132 : vector<16x1xf32>
    %134 = vector.broadcast %133 : vector<16x1xf32> to vector<16x32xf32>
    %135 = arith.divf %130, %134 : vector<16x32xf32>
    %136 = vector.broadcast %117 : vector<1x32xf32> to vector<16x32xf32>
    %137 = arith.addf %135, %136 : vector<16x32xf32>
    %138 = arith.addf %2, %137 : vector<16x32xf32>
    %c0_51 = arith.constant 0 : index
    %c0_52 = arith.constant 0 : index
    %139 = vector.load %arg9[%c0_51, %c0_52] : memref<32x64xf32, #tpu.memory_space<vmem>>, vector<32x64xf32>
    %cst_53 = arith.constant dense<0.000000e+00> : vector<16x64xf32>
    %140 = tpu.matmul %138, %139, %cst_53 {dimension_numbers = #tpu.dot_dimension_numbers<[1], [0], [0], [1], [0, 0, 1, 1], [], []>} : vector<16x32xf32>, vector<32x64xf32>, vector<16x64xf32> -> vector<16x64xf32>
    %c0_54 = arith.constant 0 : index
    %c0_55 = arith.constant 0 : index
    %141 = vector.load %arg10[%c0_54, %c0_55] : memref<1x64xf32, #tpu.memory_space<vmem>>, vector<1x64xf32>
    %142 = vector.broadcast %141 : vector<1x64xf32> to vector<16x64xf32>
    %143 = arith.addf %140, %142 : vector<16x64xf32>
    %cst_56 = arith.constant 0.000000e+00 : f32
    %144 = vector.broadcast %cst_56 : f32 to vector<16x64xf32>
    %145 = arith.maximumf %143, %144 : vector<16x64xf32>
    %c0_57 = arith.constant 0 : index
    %c0_58 = arith.constant 0 : index
    %146 = vector.load %arg11[%c0_57, %c0_58] : memref<64x32xf32, #tpu.memory_space<vmem>>, vector<64x32xf32>
    %cst_59 = arith.constant dense<0.000000e+00> : vector<16x32xf32>
    %147 = tpu.matmul %145, %146, %cst_59 {dimension_numbers = #tpu.dot_dimension_numbers<[1], [0], [0], [1], [0, 0, 1, 1], [], []>} : vector<16x64xf32>, vector<64x32xf32>, vector<16x32xf32> -> vector<16x32xf32>
    %c0_60 = arith.constant 0 : index
    %c0_61 = arith.constant 0 : index
    %148 = vector.load %arg12[%c0_60, %c0_61] : memref<1x32xf32, #tpu.memory_space<vmem>>, vector<1x32xf32>
    %149 = vector.broadcast %148 : vector<1x32xf32> to vector<16x32xf32>
    %150 = arith.addf %147, %149 : vector<16x32xf32>
    %c1 = arith.constant 1 : index
    %c0_62 = arith.constant 0 : index
    %151 = vector.load %arg7[%c1, %c0_62] : memref<2x32xf32, #tpu.memory_space<vmem>>, vector<1x32xf32>
    %c1_63 = arith.constant 1 : index
    %c0_64 = arith.constant 0 : index
    %152 = vector.load %arg8[%c1_63, %c0_64] : memref<2x32xf32, #tpu.memory_space<vmem>>, vector<1x32xf32>
    %cst_65 = arith.constant dense<0.000000e+00> : vector<16xf32>
    %153 = vector.multi_reduction <add>, %150, %cst_65 [1] : vector<16x32xf32> to vector<16xf32>
    %154 = vector.shape_cast %153 : vector<16xf32> to vector<16x1xf32>
    %cst_66 = arith.constant 3.200000e+01 : f32
    %155 = vector.broadcast %cst_66 : f32 to vector<16x1xf32>
    %156 = arith.divf %154, %155 : vector<16x1xf32>
    %157 = vector.broadcast %156 : vector<16x1xf32> to vector<16x32xf32>
    %158 = arith.subf %150, %157 : vector<16x32xf32>
    %159 = arith.mulf %158, %158 : vector<16x32xf32>
    %cst_67 = arith.constant dense<0.000000e+00> : vector<16xf32>
    %160 = vector.multi_reduction <add>, %159, %cst_67 [1] : vector<16x32xf32> to vector<16xf32>
    %161 = vector.shape_cast %160 : vector<16xf32> to vector<16x1xf32>
    %cst_68 = arith.constant 3.100000e+01 : f32
    %162 = vector.broadcast %cst_68 : f32 to vector<16x1xf32>
    %163 = arith.divf %161, %162 : vector<16x1xf32>
    %164 = vector.broadcast %151 : vector<1x32xf32> to vector<16x32xf32>
    %165 = arith.mulf %164, %158 : vector<16x32xf32>
    %166 = math.sqrt %163 : vector<16x1xf32>
    %cst_69 = arith.constant 9.99999997E-7 : f32
    %167 = vector.broadcast %cst_69 : f32 to vector<16x1xf32>
    %168 = arith.addf %166, %167 : vector<16x1xf32>
    %169 = vector.broadcast %168 : vector<16x1xf32> to vector<16x32xf32>
    %170 = arith.divf %165, %169 : vector<16x32xf32>
    %171 = vector.broadcast %152 : vector<1x32xf32> to vector<16x32xf32>
    %172 = arith.addf %170, %171 : vector<16x32xf32>
    %173 = arith.addf %138, %172 : vector<16x32xf32>
    %174 = vector.shape_cast %173 : vector<16x32xf32> to vector<2x8x32xf32>
    %c0_70 = arith.constant 0 : index
    %c0_71 = arith.constant 0 : index
    %c0_72 = arith.constant 0 : index
    %175 = vector.load %arg13[%c0_70, %c0_71, %c0_72] : memref<2x8x32xf32, #tpu.memory_space<vmem>>, vector<2x8x32xf32>
    tpu.vector_store %arg13[%c0_70, %c0_71, %c0_72], %174 {strides = array<i32>} : memref<2x8x32xf32, #tpu.memory_space<vmem>>, vector<2x8x32xf32>,
    return
  }
  func.func @transform_0(%arg0: i32, %arg1: memref<2xi32, #tpu.memory_space<smem>>) -> (i32, i32, i32) {
    %c0_i32 = arith.constant 0 : i32
    %c0_i32_0 = arith.constant 0 : i32
    %c0_i32_1 = arith.constant 0 : i32
    return %arg0, %c0_i32, %c0_i32_0 : i32, i32, i32
  }
  func.func @transform_1(%arg0: i32, %arg1: memref<2xi32, #tpu.memory_space<smem>>) -> (i32, i32) {
    %c0_i32 = arith.constant 0 : i32
    %c0_i32_0 = arith.constant 0 : i32
    %c0_i32_1 = arith.constant 0 : i32
    return %c0_i32, %c0_i32_0 : i32, i32
  }
  func.func @transform_2(%arg0: i32, %arg1: memref<2xi32, #tpu.memory_space<smem>>) -> (i32, i32) {
    %c0_i32 = arith.constant 0 : i32
    %c0_i32_0 = arith.constant 0 : i32
    %c0_i32_1 = arith.constant 0 : i32
    return %c0_i32, %c0_i32_0 : i32, i32
  }
  func.func @transform_3(%arg0: i32, %arg1: memref<2xi32, #tpu.memory_space<smem>>) -> (i32, i32) {
    %c0_i32 = arith.constant 0 : i32
    %c0_i32_0 = arith.constant 0 : i32
    %c0_i32_1 = arith.constant 0 : i32
    return %c0_i32, %c0_i32_0 : i32, i32
  }
  func.func @transform_4(%arg0: i32, %arg1: memref<2xi32, #tpu.memory_space<smem>>) -> (i32, i32) {
    %c0_i32 = arith.constant 0 : i32
    %c0_i32_0 = arith.constant 0 : i32
    %c0_i32_1 = arith.constant 0 : i32
    return %c0_i32, %c0_i32_0 : i32, i32
  }
  func.func @transform_5(%arg0: i32, %arg1: memref<2xi32, #tpu.memory_space<smem>>) -> (i32, i32) {
    %c0_i32 = arith.constant 0 : i32
    %c0_i32_0 = arith.constant 0 : i32
    %c0_i32_1 = arith.constant 0 : i32
    return %c0_i32, %c0_i32_0 : i32, i32
  }
  func.func @transform_6(%arg0: i32, %arg1: memref<2xi32, #tpu.memory_space<smem>>) -> (i32, i32) {
    %c0_i32 = arith.constant 0 : i32
    %c0_i32_0 = arith.constant 0 : i32
    %c0_i32_1 = arith.constant 0 : i32
    return %c0_i32, %c0_i32_0 : i32, i32
  }
  func.func @transform_7(%arg0: i32, %arg1: memref<2xi32, #tpu.memory_space<smem>>) -> (i32, i32) {
    %c0_i32 = arith.constant 0 : i32
    %c0_i32_0 = arith.constant 0 : i32
    %c0_i32_1 = arith.constant 0 : i32
    return %c0_i32, %c0_i32_0 : i32, i32
  }
  func.func @transform_8(%arg0: i32, %arg1: memref<2xi32, #tpu.memory_space<smem>>) -> (i32, i32) {
    %c0_i32 = arith.constant 0 : i32
    %c0_i32_0 = arith.constant 0 : i32
    %c0_i32_1 = arith.constant 0 : i32
    return %c0_i32, %c0_i32_0 : i32, i32
  }
  func.func @transform_9(%arg0: i32, %arg1: memref<2xi32, #tpu.memory_space<smem>>) -> (i32, i32) {
    %c0_i32 = arith.constant 0 : i32
    %c0_i32_0 = arith.constant 0 : i32
    %c0_i32_1 = arith.constant 0 : i32
    return %c0_i32, %c0_i32_0 : i32, i32
  }
  func.func @transform_10(%arg0: i32, %arg1: memref<2xi32, #tpu.memory_space<smem>>) -> (i32, i32) {
    %c0_i32 = arith.constant 0 : i32
    %c0_i32_0 = arith.constant 0 : i32
    %c0_i32_1 = arith.constant 0 : i32
    return %c0_i32, %c0_i32_0 : i32, i32
  }
  func.func @transform_11(%arg0: i32, %arg1: memref<2xi32, #tpu.memory_space<smem>>) -> (i32, i32, i32) {
    %c0_i32 = arith.constant 0 : i32
    %c0_i32_0 = arith.constant 0 : i32
    %c0_i32_1 = arith.constant 0 : i32
    return %arg0, %c0_i32, %c0_i32_0 : i32, i32, i32
  }
}

</mosaic_0001>

<llo_original>
// kernel: tpu_custom_call.1
$region0: #{tpu_custom_call.1}
  #allocation0 [shape = 'u32[]', space=smem, size = 0x4, offset = 0x4, fixed_abs, tag = 'smem constant byte address 0x4 - core index']
  #allocation1 [shape = 'u32[144,128]{1,0:T(1,128)}', space=vmem, size = 0x12000, scoped, tag = 'internal scratch']
  #allocation2 [shape = 'f32[16,32]{1,0:T(8,128)}', space=vmem, size = 0x2000, scoped, tag = 'scratch operand']
  #allocation3 [shape = 's32[1]{0}', space=sflag, size = 0x4, scoped, tag = 'scoped memory for tpu_custom_call.1']
  #allocation4 [shape = 'u8[512]{0}', space=smem, size = 0x200, scoped, tag = 'prefetched SMEM operand 0']
  %s0 = inlined_call_operand.hbm [shape: s32[2], index: 0, kind: input, shape index: {}]
  %s1 = inlined_call_operand.hbm [shape: f32[2,8,32], index: 1, kind: input, shape index: {}]
  %s2 = inlined_call_operand.vmem [shape: f32[32,96], index: 2, kind: input, shape index: {}]
  %s3 = inlined_call_operand.vmem [shape: f32[1,96], index: 3, kind: input, shape index: {}]
  %s4 = inlined_call_operand.vmem [shape: f32[32,32], index: 4, kind: input, shape index: {}]
  %s5 = inlined_call_operand.hbm [shape: f32[1,32], index: 5, kind: input, shape index: {}]
  %s6 = inlined_call_operand.vmem [shape: f32[2,32], index: 6, kind: input, shape index: {}]
  %s7 = inlined_call_operand.vmem [shape: f32[2,32], index: 7, kind: input, shape index: {}]
  %s8 = inlined_call_operand.vmem [shape: f32[32,64], index: 8, kind: input, shape index: {}]
  %s9 = inlined_call_operand.hbm [shape: f32[1,64], index: 9, kind: input, shape index: {}]
  %s10 = inlined_call_operand.vmem [shape: f32[64,32], index: 10, kind: input, shape index: {}]
  %s11 = inlined_call_operand.vmem [shape: f32[1,32], index: 11, kind: input, shape index: {}]
  %s12 = inlined_call_operand.hbm [shape: f32[2,8,32], index: 12, kind: output, shape index: {}]
  %s13 = sld [smem:[#allocation0]]
  $region66: #{tpu_custom_call.1} parent=0
    _
  %s15 = ssub.s32 1, %s13
  %s16 = scalar_select 0, %s15, %s13
  %18 = dma.hbm_to_smem %s0, 16, [#allocation4], [#allocation3]
  %19 = dma.done [#allocation3], 16
  %20 = sfence
  $region1: #{tpu_custom_call.1} parent=0
    #allocation5 [shape = 'u8[8192]{0}', space=vmem, size = 0x2000, scoped, tag = 'input window, operand 1, single buffered']
    #allocation6 [shape = 's32[1]{0}', space=sflag, size = 0x4, scoped, tag = 'scoped memory for tpu_custom_call.1']
    #allocation7 [shape = 's32[1]{0}', space=sflag, size = 0x4, scoped, tag = 'scoped memory for tpu_custom_call.1']
    #allocation8 [shape = 'u8[512]{0}', space=vmem, size = 0x400, scoped, tag = 'input window, operand 5, single buffered']
    #allocation9 [shape = 's32[1]{0}', space=sflag, size = 0x4, scoped, tag = 'scoped memory for tpu_custom_call.1']
    #allocation10 [shape = 'u8[512]{0}', space=vmem, size = 0x400, scoped, tag = 'input window, operand 9, single buffered']
    #allocation11 [shape = 'u8[8192]{0}', space=vmem, size = 0x2000, scoped, tag = 'output window, operand 0, single buffered']
    %21 = vsyncpa [#allocation6], 0
    %22 = vsyncpa [#allocation9], 0
    %23 = vsyncpa [#allocation7], 0
    // Predicated region
    $region2: #{tpu_custom_call.1} parent=1 // pred_check
      _
    $region3: #{tpu_custom_call.1} parent=1 // pred_check_branch
      %25 = sbr.rel (0) target = $region5
    $region4: #{tpu_custom_call.1} parent=1 // pred_region
      %s27 = ssub.s32 256, 256
      %28 = vsyncadd [#allocation6], %s27
      %s29 = sshll.u32 [#allocation5], 4
      %s30 = int_to_ptr.vmem [resolvable:$true] %s29
      %35 = dma.hbm_to_vmem [thread:$0]  %s1, 256, %s30, [#allocation6], 128, 128, 8
    $region5: #{tpu_custom_call.1} parent=1 // pred_fallthru
      _
    // Predicated region
    $region6: #{tpu_custom_call.1} parent=1 // pred_check
      _
    $region7: #{tpu_custom_call.1} parent=1 // pred_check_branch
      %37 = sbr.rel (0) target = $region9
    $region8: #{tpu_custom_call.1} parent=1 // pred_region
      _
    $region9: #{tpu_custom_call.1} parent=1 // pred_fallthru
      _
    // Predicated region
    $region10: #{tpu_custom_call.1} parent=1 // pred_check
      _
    $region11: #{tpu_custom_call.1} parent=1 // pred_check_branch
      %39 = sbr.rel (0) target = $region13
    $region12: #{tpu_custom_call.1} parent=1 // pred_region
      _
    $region13: #{tpu_custom_call.1} parent=1 // pred_fallthru
      _
    // Predicated region
    $region14: #{tpu_custom_call.1} parent=1 // pred_check
      _
    $region15: #{tpu_custom_call.1} parent=1 // pred_check_branch
      %41 = sbr.rel (0) target = $region17
    $region16: #{tpu_custom_call.1} parent=1 // pred_region
      _
    $region17: #{tpu_custom_call.1} parent=1 // pred_fallthru
      _
    // Predicated region
    $region18: #{tpu_custom_call.1} parent=1 // pred_check
      _
    $region19: #{tpu_custom_call.1} parent=1 // pred_check_branch
      %43 = sbr.rel (0) target = $region21
    $region20: #{tpu_custom_call.1} parent=1 // pred_region
      %s45 = ssub.s32 16, 16
      %46 = vsyncadd [#allocation9], %s45
      %s48 = sshll.u32 [#allocation8], 4
      %s49 = int_to_ptr.vmem [resolvable:$true] %s48
      %51 = dma.hbm_to_vmem [thread:$0]  %s5, 16, %s49, [#allocation9]
    $region21: #{tpu_custom_call.1} parent=1 // pred_fallthru
      _
    // Predicated region
    $region22: #{tpu_custom_call.1} parent=1 // pred_check
      _
    $region23: #{tpu_custom_call.1} parent=1 // pred_check_branch
      %53 = sbr.rel (0) target = $region25
    $region24: #{tpu_custom_call.1} parent=1 // pred_region
      _
    $region25: #{tpu_custom_call.1} parent=1 // pred_fallthru
      _
    // Predicated region
    $region26: #{tpu_custom_call.1} parent=1 // pred_check
      _
    $region27: #{tpu_custom_call.1} parent=1 // pred_check_branch
      %55 = sbr.rel (0) target = $region29
    $region28: #{tpu_custom_call.1} parent=1 // pred_region
      _
    $region29: #{tpu_custom_call.1} parent=1 // pred_fallthru
      _
    // Predicated region
    $region30: #{tpu_custom_call.1} parent=1 // pred_check
      _
    $region31: #{tpu_custom_call.1} parent=1 // pred_check_branch
      %57 = sbr.rel (0) target = $region33
    $region32: #{tpu_custom_call.1} parent=1 // pred_region
      _
    $region33: #{tpu_custom_call.1} parent=1 // pred_fallthru
      _
    // Predicated region
    $region34: #{tpu_custom_call.1} parent=1 // pred_check
      _
    $region35: #{tpu_custom_call.1} parent=1 // pred_check_branch
      %59 = sbr.rel (0) target = $region37
    $region36: #{tpu_custom_call.1} parent=1 // pred_region
      %s61 = ssub.s32 16, 16
      %62 = vsyncadd [#allocation9], %s61
      %s64 = sshll.u32 [#allocation10], 4
      %s65 = int_to_ptr.vmem [resolvable:$true] %s64
      %67 = dma.hbm_to_vmem [thread:$0]  %s9, 16, %s65, [#allocation9]
    $region37: #{tpu_custom_call.1} parent=1 // pred_fallthru
      _
    // Predicated region
    $region38: #{tpu_custom_call.1} parent=1 // pred_check
      _
    $region39: #{tpu_custom_call.1} parent=1 // pred_check_branch
      %69 = sbr.rel (0) target = $region41
    $region40: #{tpu_custom_call.1} parent=1 // pred_region
      _
    $region41: #{tpu_custom_call.1} parent=1 // pred_fallthru
      _
    // Predicated region
    $region42: #{tpu_custom_call.1} parent=1 // pred_check
      _
    $region43: #{tpu_custom_call.1} parent=1 // pred_check_branch
      %71 = sbr.rel (0) target = $region45
    $region44: #{tpu_custom_call.1} parent=1 // pred_region
      _
    $region45: #{tpu_custom_call.1} parent=1 // pred_fallthru
      _
    // Predicated region
    $region46: #{tpu_custom_call.1} parent=1 // pred_check
      _
    $region47: #{tpu_custom_call.1} parent=1 // pred_check_branch
      %73 = sbr.rel (0) target = $region49
    $region48: #{tpu_custom_call.1} parent=1 // pred_region
      %74 = dma.done [#allocation6], 256
    $region49: #{tpu_custom_call.1} parent=1 // pred_fallthru
      _
    // Predicated region
    $region50: #{tpu_custom_call.1} parent=1 // pred_check
      _
    $region51: #{tpu_custom_call.1} parent=1 // pred_check_branch
      %76 = sbr.rel (0) target = $region53
    $region52: #{tpu_custom_call.1} parent=1 // pred_region
      %77 = dma.done [#allocation9], 16
    $region53: #{tpu_custom_call.1} parent=1 // pred_fallthru
      _
    // Predicated region
    $region54: #{tpu_custom_call.1} parent=1 // pred_check
      _
    $region55: #{tpu_custom_call.1} parent=1 // pred_check_branch
      %79 = sbr.rel (0) target = $region57
    $region56: #{tpu_custom_call.1} parent=1 // pred_region
      %80 = dma.done [#allocation9], 16
    $region57: #{tpu_custom_call.1} parent=1 // pred_fallthru
      _
    %s81 = smul.u32 0, 2
    %v82 = vld [vmem:[#allocation5] sm:$0xff]
    %v83 = vld [vmem:[#allocation5 + $0x8] sm:$0xff]
    %v84 = vld [vmem:[%s2] sm:$0xff]
    %v85 = vld [vmem:[%s2 + $0x8] sm:$0xff]
    %v86 = vld [vmem:[%s2 + $0x10] sm:$0xff]
    %v87 = vld [vmem:[%s2 + $0x18] sm:$0xff]
    %v88 = vld [vmem:[%s3] sm:$0x1]
    %v90 = vlaneseq
    %v91 = vshrl.u32 %v90, 7
    %v92 = vsub.s32 0, %v91
    %v93 = vrot.slane %v88, %v92
    %vm95 = vcmask 261120
    %v97 = vsel %vm95, %v82, 0
    %v100 = vsel %vm95, %v83, 0
    %102 = vmatprep.subr.mxu0 0.0
    %103 = vmatpush1.msra.mxu0 %v84
    %104 = vmatprep.subr.mxu0 0.0
    %105 = vmatpush1.msra.mxu0 %v85
    %106 = vmatprep.subr.mxu0 0.0
    %107 = vmatpush1.msra.mxu0 %v86
    %108 = vmatprep.subr.mxu0 0.0
    %109 = vmatpush1.msra.mxu0 %v87
    %110 = vmatprep.subr.mxu0 0.0
    %111 = vmatpush1.msra.mxu0 0.0
    %112 = vmatprep.subr.mxu0 0.0
    %113 = vmatpush1.msra.mxu0 0.0
    %114 = vmatprep.subr.mxu0 0.0
    %115 = vmatpush1.msra.mxu0 0.0
    %116 = vmatprep.subr.mxu0 0.0
    %117 = vmatpush1.msra.mxu0 0.0
    %118 = vmatprep.subr.mxu0 0.0
    %119 = vmatpush1.msra.mxu0 0.0
    %120 = vmatprep.subr.mxu0 0.0
    %121 = vmatpush1.msra.mxu0 0.0
    %122 = vmatprep.subr.mxu0 0.0
    %123 = vmatpush1.msra.mxu0 0.0
    %124 = vmatprep.subr.mxu0 0.0
    %125 = vmatpush1.msra.mxu0 0.0
    %126 = vmatprep.subr.mxu0 0.0
    %127 = vmatpush1.msra.mxu0 0.0
    %128 = vmatprep.subr.mxu0 0.0
    %129 = vmatpush1.msra.mxu0 0.0
    %130 = vmatprep.subr.mxu0 0.0
    %131 = vmatpush1.msra.mxu0 0.0
    %132 = vmatprep.subr.mxu0 0.0
    %133 = vmatpush1.msra.mxu0 0.0
    %134 = vmatprep.subr.mxu0 0.0
    %135 = vmatpush1.msra.mxu0 0.0
    %136 = vmatprep.subr.mxu0 0.0
    %137 = vmatpush1.msra.mxu0 0.0
    %138 = vmatprep.subr.mxu0 0.0
    %139 = vmatpush1.msra.mxu0 0.0
    %140 = vmatprep.subr.mxu0 0.0
    %141 = vmatpush1.msra.mxu0 0.0
    %142 = vmatprep.subr.mxu0 0.0
    %143 = vmatpush1.msra.mxu0 0.0
    %144 = vmatprep.subr.mxu0 0.0
    %145 = vmatpush1.msra.mxu0 0.0
    %146 = vmatprep.subr.mxu0 0.0
    %147 = vmatpush1.msra.mxu0 0.0
    %148 = vmatprep.subr.mxu0 0.0
    %149 = vmatpush1.msra.mxu0 0.0
    %150 = vmatprep.subr.mxu0 0.0
    %151 = vmatpush1.msra.mxu0 0.0
    %152 = vmatprep.subr.mxu0 0.0
    %153 = vmatpush1.msra.mxu0 0.0
    %154 = vmatprep.subr.mxu0 0.0
    %155 = vmatpush1.msra.mxu0 0.0
    %156 = vmatprep.subr.mxu0 0.0
    %157 = vmatpush1.msra.mxu0 0.0
    %158 = vmatprep.subr.mxu0 0.0
    %159 = vmatpush1.msra.mxu0 0.0
    %160 = vmatprep.subr.mxu0 0.0
    %161 = vmatpush1.msra.mxu0 0.0
    %162 = vmatprep.subr.mxu0 0.0
    %163 = vmatpush1.msra.mxu0 0.0
    %164 = vmatprep.subr.mxu0 0.0
    %165 = vmatpush1.msra.mxu0 0.0
    %166 = vmatprep.mubr.f32.mxu0 0.0
    %167 = vmatmul.mubr.f32.gmra.mrb[0].mxu0 %v97
    %v168 = vpop.f32.mrb[0].mxu0
    %v169 = vadd.f32 %v93, %v168
    %v170 = vpop.f32.mrb[0].mxu0
    %171 = vmatprep.mubr.f32.mxu0 0.0
    %172 = vmatmul.mubr.f32.gmra.mrb[0].mxu0 %v100
    %v173 = vpop.f32.mrb[0].mxu0
    %v174 = vadd.f32 %v93, %v173
    %v175 = vpop.f32.mrb[0].mxu0
    %176 = vdwg.mxu0
    %v177 = vmul.f32 %v169, 0.35355338
    %v178 = vmul.f32 %v174, 0.35355338
    %v179 = vlaneseq
    %v180 = vand.u32 %v179, 127
    %s181 = sld [smem:[#allocation4 + %s81]]
    %v182 = vstv %s181
    %s183 = sadd.s32 %s81, 1
    %s184 = sld [smem:[#allocation4 + %s183]]
    %v185 = vstv %s184
    %vm186 = vcmp.lt.s32.totalorder %v180, %v182
    %vm187 = vcmp.lt.s32.totalorder %v180, %v185
    %189 = vrot.lane.b32.xlu0 %v169, 96
    %v190 = vpop.permute.xlu0 %189
    %vm191 = vcmask 64512
    %v193 = vsel %vm191, %v177, 0
    %v195 = vsel %vm191, %v190, 0
    %197 = vmatprep.subr.mxu0 0.0
    %198 = vmatpush1.xpose.msra.mxu0 %v195
    %199 = vmatprep.subr.mxu0 0.0
    %200 = vmatpush1.xpose.msra.mxu0 0.0
    %201 = vmatprep.subr.mxu0 0.0
    %202 = vmatpush1.xpose.msra.mxu0 0.0
    %203 = vmatprep.subr.mxu0 0.0
    %204 = vmatpush1.xpose.msra.mxu0 0.0
    %205 = vmatprep.subr.mxu0 0.0
    %206 = vmatpush1.xpose.msra.mxu0 0.0
    %207 = vmatprep.subr.mxu0 0.0
    %208 = vmatpush1.xpose.msra.mxu0 0.0
    %209 = vmatprep.subr.mxu0 0.0
    %210 = vmatpush1.xpose.msra.mxu0 0.0
    %211 = vmatprep.subr.mxu0 0.0
    %212 = vmatpush1.xpose.msra.mxu0 0.0
    %213 = vmatprep.subr.mxu0 0.0
    %214 = vmatpush1.xpose.msra.mxu0 0.0
    %215 = vmatprep.subr.mxu0 0.0
    %216 = vmatpush1.xpose.msra.mxu0 0.0
    %217 = vmatprep.subr.mxu0 0.0
    %218 = vmatpush1.xpose.msra.mxu0 0.0
    %219 = vmatprep.subr.mxu0 0.0
    %220 = vmatpush1.xpose.msra.mxu0 0.0
    %221 = vmatprep.subr.mxu0 0.0
    %222 = vmatpush1.xpose.msra.mxu0 0.0
    %223 = vmatprep.subr.mxu0 0.0
    %224 = vmatpush1.xpose.msra.mxu0 0.0
    %225 = vmatprep.subr.mxu0 0.0
    %226 = vmatpush1.xpose.msra.mxu0 0.0
    %227 = vmatprep.subr.mxu0 0.0
    %228 = vmatpush1.xpose.msra.mxu0 0.0
    %229 = vmatprep.subr.mxu0 0.0
    %230 = vmatpush1.xpose.msra.mxu0 0.0
    %231 = vmatprep.subr.mxu0 0.0
    %232 = vmatpush1.xpose.msra.mxu0 0.0
    %233 = vmatprep.subr.mxu0 0.0
    %234 = vmatpush1.xpose.msra.mxu0 0.0
    %235 = vmatprep.subr.mxu0 0.0
    %236 = vmatpush1.xpose.msra.mxu0 0.0
    %237 = vmatprep.subr.mxu0 0.0
    %238 = vmatpush1.xpose.msra.mxu0 0.0
    %239 = vmatprep.subr.mxu0 0.0
    %240 = vmatpush1.xpose.msra.mxu0 0.0
    %241 = vmatprep.subr.mxu0 0.0
    %242 = vmatpush1.xpose.msra.mxu0 0.0
    %243 = vmatprep.subr.mxu0 0.0
    %244 = vmatpush1.xpose.msra.mxu0 0.0
    %245 = vmatprep.subr.mxu0 0.0
    %246 = vmatpush1.xpose.msra.mxu0 0.0
    %247 = vmatprep.subr.mxu0 0.0
    %248 = vmatpush1.xpose.msra.mxu0 0.0
    %249 = vmatprep.subr.mxu0 0.0
    %250 = vmatpush1.xpose.msra.mxu0 0.0
    %251 = vmatprep.subr.mxu0 0.0
    %252 = vmatpush1.xpose.msra.mxu0 0.0
    %253 = vmatprep.subr.mxu0 0.0
    %254 = vmatpush1.xpose.msra.mxu0 0.0
    %255 = vmatprep.subr.mxu0 0.0
    %256 = vmatpush1.xpose.msra.mxu0 0.0
    %257 = vmatprep.subr.mxu0 0.0
    %258 = vmatpush1.xpose.msra.mxu0 0.0
    %259 = vmatprep.subr.mxu0 0.0
    %260 = vmatpush1.xpose.msra.mxu0 0.0
    %261 = vmatprep.mubr.f32.mxu0 0.0
    %262 = vmatmul.mubr.f32.gmra.mrb[0].mxu0 %v193
    %v263 = vpop.f32.mrb[0].mxu0
    %v264 = vadd.f32 0.0, %v263
    %v265 = vpop.f32.mrb[0].mxu0
    %266 = vdwg.mxu0
    %268 = vrot.lane.b32.xlu0 %v174, 96
    %v269 = vpop.permute.xlu0 %268
    %v271 = vsel %vm191, %v178, 0
    %v273 = vsel %vm191, %v269, 0
    %275 = vmatprep.subr.mxu0 0.0
    %276 = vmatpush1.xpose.msra.mxu0 %v273
    %277 = vmatprep.subr.mxu0 0.0
    %278 = vmatpush1.xpose.msra.mxu0 0.0
    %279 = vmatprep.subr.mxu0 0.0
    %280 = vmatpush1.xpose.msra.mxu0 0.0
    %281 = vmatprep.subr.mxu0 0.0
    %282 = vmatpush1.xpose.msra.mxu0 0.0
    %283 = vmatprep.subr.mxu0 0.0
    %284 = vmatpush1.xpose.msra.mxu0 0.0
    %285 = vmatprep.subr.mxu0 0.0
    %286 = vmatpush1.xpose.msra.mxu0 0.0
    %287 = vmatprep.subr.mxu0 0.0
    %288 = vmatpush1.xpose.msra.mxu0 0.0
    %289 = vmatprep.subr.mxu0 0.0
    %290 = vmatpush1.xpose.msra.mxu0 0.0
    %291 = vmatprep.subr.mxu0 0.0
    %292 = vmatpush1.xpose.msra.mxu0 0.0
    %293 = vmatprep.subr.mxu0 0.0
    %294 = vmatpush1.xpose.msra.mxu0 0.0
    %295 = vmatprep.subr.mxu0 0.0
    %296 = vmatpush1.xpose.msra.mxu0 0.0
    %297 = vmatprep.subr.mxu0 0.0
    %298 = vmatpush1.xpose.msra.mxu0 0.0
    %299 = vmatprep.subr.mxu0 0.0
    %300 = vmatpush1.xpose.msra.mxu0 0.0
    %301 = vmatprep.subr.mxu0 0.0
    %302 = vmatpush1.xpose.msra.mxu0 0.0
    %303 = vmatprep.subr.mxu0 0.0
    %304 = vmatpush1.xpose.msra.mxu0 0.0
    %305 = vmatprep.subr.mxu0 0.0
    %306 = vmatpush1.xpose.msra.mxu0 0.0
    %307 = vmatprep.subr.mxu0 0.0
    %308 = vmatpush1.xpose.msra.mxu0 0.0
    %309 = vmatprep.subr.mxu0 0.0
    %310 = vmatpush1.xpose.msra.mxu0 0.0
    %311 = vmatprep.subr.mxu0 0.0
    %312 = vmatpush1.xpose.msra.mxu0 0.0
    %313 = vmatprep.subr.mxu0 0.0
    %314 = vmatpush1.xpose.msra.mxu0 0.0
    %315 = vmatprep.subr.mxu0 0.0
    %316 = vmatpush1.xpose.msra.mxu0 0.0
    %317 = vmatprep.subr.mxu0 0.0
    %318 = vmatpush1.xpose.msra.mxu0 0.0
    %319 = vmatprep.subr.mxu0 0.0
    %320 = vmatpush1.xpose.msra.mxu0 0.0
    %321 = vmatprep.subr.mxu0 0.0
    %322 = vmatpush1.xpose.msra.mxu0 0.0
    %323 = vmatprep.subr.mxu0 0.0
    %324 = vmatpush1.xpose.msra.mxu0 0.0
    %325 = vmatprep.subr.mxu0 0.0
    %326 = vmatpush1.xpose.msra.mxu0 0.0
    %327 = vmatprep.subr.mxu0 0.0
    %328 = vmatpush1.xpose.msra.mxu0 0.0
    %329 = vmatprep.subr.mxu0 0.0
    %330 = vmatpush1.xpose.msra.mxu0 0.0
    %331 = vmatprep.subr.mxu0 0.0
    %332 = vmatpush1.xpose.msra.mxu0 0.0
    %333 = vmatprep.subr.mxu0 0.0
    %334 = vmatpush1.xpose.msra.mxu0 0.0
    %335 = vmatprep.subr.mxu0 0.0
    %336 = vmatpush1.xpose.msra.mxu0 0.0
    %337 = vmatprep.subr.mxu0 0.0
    %338 = vmatpush1.xpose.msra.mxu0 0.0
    %339 = vmatprep.mubr.f32.mxu0 0.0
    %340 = vmatmul.mubr.f32.gmra.mrb[0].mxu0 %v271
    %v341 = vpop.f32.mrb[0].mxu0
    %v342 = vadd.f32 0.0, %v341
    %v343 = vpop.f32.mrb[0].mxu0
    %344 = vdwg.mxu0
    %v345 = vsel %vm186, %v264, -1e+09
    %v346 = vsel %vm187, %v342, -1e+09
    %v347 = vsel %vm191, %v345, -inf
    %348 = vmax.xlane.f32.xlu0 %v347
    %v349 = vpop.xlane.xlu0 %348
    %v350 = vsel %vm191, %v346, -inf
    %351 = vmax.xlane.f32.xlu0 %v350
    %v352 = vpop.xlane.xlu0 %351
    %v353 = vsub.f32 %v345, %v349
    %v354 = vsub.f32 %v346, %v352
    %v355 = vmul.f32 %v353, 1.442695
    %v356 = vpow.pop %v355
    %v357 = vmul.f32 %v354, 1.442695
    %v358 = vpow.pop %v357
    %v359 = vsel %vm191, %v356, 0.0
    %360 = vadd.xlane.f32.xlu0 %v359
    %v361 = vpop.xlane.xlu0 %360
    %v362 = vsel %vm191, %v358, 0.0
    %363 = vadd.xlane.f32.xlu0 %v362
    %v364 = vpop.xlane.xlu0 %363
    %v365 = vrcp.pop %v361
    %v366 = vrcp.pop %v364
    %v367 = vmul.f32 %v356, %v365
    %v368 = vmul.f32 %v358, %v366
    %369 = vrot.lane.b32.xlu0 %v169, 64
    %v370 = vpop.permute.xlu0 %369
    %v373 = vsel %vm191, %v367, 0
    %375 = vmatprep.subr.mxu0 0.0
    %376 = vmatpush1.msra.mxu0 %v370
    %377 = vmatprep.subr.mxu0 0.0
    %378 = vmatpush1.msra.mxu0 0.0
    %379 = vmatprep.subr.mxu0 0.0
    %380 = vmatpush1.msra.mxu0 0.0
    %381 = vmatprep.subr.mxu0 0.0
    %382 = vmatpush1.msra.mxu0 0.0
    %383 = vmatprep.subr.mxu0 0.0
    %384 = vmatpush1.msra.mxu0 0.0
    %385 = vmatprep.subr.mxu0 0.0
    %386 = vmatpush1.msra.mxu0 0.0
    %387 = vmatprep.subr.mxu0 0.0
    %388 = vmatpush1.msra.mxu0 0.0
    %389 = vmatprep.subr.mxu0 0.0
    %390 = vmatpush1.msra.mxu0 0.0
    %391 = vmatprep.subr.mxu0 0.0
    %392 = vmatpush1.msra.mxu0 0.0
    %393 = vmatprep.subr.mxu0 0.0
    %394 = vmatpush1.msra.mxu0 0.0
    %395 = vmatprep.subr.mxu0 0.0
    %396 = vmatpush1.msra.mxu0 0.0
    %397 = vmatprep.subr.mxu0 0.0
    %398 = vmatpush1.msra.mxu0 0.0
    %399 = vmatprep.subr.mxu0 0.0
    %400 = vmatpush1.msra.mxu0 0.0
    %401 = vmatprep.subr.mxu0 0.0
    %402 = vmatpush1.msra.mxu0 0.0
    %403 = vmatprep.subr.mxu0 0.0
    %404 = vmatpush1.msra.mxu0 0.0
    %405 = vmatprep.subr.mxu0 0.0
    %406 = vmatpush1.msra.mxu0 0.0
    %407 = vmatprep.subr.mxu0 0.0
    %408 = vmatpush1.msra.mxu0 0.0
    %409 = vmatprep.subr.mxu0 0.0
    %410 = vmatpush1.msra.mxu0 0.0
    %411 = vmatprep.subr.mxu0 0.0
    %412 = vmatpush1.msra.mxu0 0.0
    %413 = vmatprep.subr.mxu0 0.0
    %414 = vmatpush1.msra.mxu0 0.0
    %415 = vmatprep.subr.mxu0 0.0
    %416 = vmatpush1.msra.mxu0 0.0
    %417 = vmatprep.subr.mxu0 0.0
    %418 = vmatpush1.msra.mxu0 0.0
    %419 = vmatprep.subr.mxu0 0.0
    %420 = vmatpush1.msra.mxu0 0.0
    %421 = vmatprep.subr.mxu0 0.0
    %422 = vmatpush1.msra.mxu0 0.0
    %423 = vmatprep.subr.mxu0 0.0
    %424 = vmatpush1.msra.mxu0 0.0
    %425 = vmatprep.subr.mxu0 0.0
    %426 = vmatpush1.msra.mxu0 0.0
    %427 = vmatprep.subr.mxu0 0.0
    %428 = vmatpush1.msra.mxu0 0.0
    %429 = vmatprep.subr.mxu0 0.0
    %430 = vmatpush1.msra.mxu0 0.0
    %431 = vmatprep.subr.mxu0 0.0
    %432 = vmatpush1.msra.mxu0 0.0
    %433 = vmatprep.subr.mxu0 0.0
    %434 = vmatpush1.msra.mxu0 0.0
    %435 = vmatprep.subr.mxu0 0.0
    %436 = vmatpush1.msra.mxu0 0.0
    %437 = vmatprep.subr.mxu0 0.0
    %438 = vmatpush1.msra.mxu0 0.0
    %439 = vmatprep.mubr.f32.mxu0 0.0
    %440 = vmatmul.mubr.f32.gmra.mrb[0].mxu0 %v373
    %v441 = vpop.f32.mrb[0].mxu0
    %v442 = vadd.f32 0.0, %v441
    %v443 = vpop.f32.mrb[0].mxu0
    %444 = vdwg.mxu0
    %445 = vrot.lane.b32.xlu0 %v174, 64
    %v446 = vpop.permute.xlu0 %445
    %v449 = vsel %vm191, %v368, 0
    %451 = vmatprep.subr.mxu0 0.0
    %452 = vmatpush1.msra.mxu0 %v446
    %453 = vmatprep.subr.mxu0 0.0
    %454 = vmatpush1.msra.mxu0 0.0
    %455 = vmatprep.subr.mxu0 0.0
    %456 = vmatpush1.msra.mxu0 0.0
    %457 = vmatprep.subr.mxu0 0.0
    %458 = vmatpush1.msra.mxu0 0.0
    %459 = vmatprep.subr.mxu0 0.0
    %460 = vmatpush1.msra.mxu0 0.0
    %461 = vmatprep.subr.mxu0 0.0
    %462 = vmatpush1.msra.mxu0 0.0
    %463 = vmatprep.subr.mxu0 0.0
    %464 = vmatpush1.msra.mxu0 0.0
    %465 = vmatprep.subr.mxu0 0.0
    %466 = vmatpush1.msra.mxu0 0.0
    %467 = vmatprep.subr.mxu0 0.0
    %468 = vmatpush1.msra.mxu0 0.0
    %469 = vmatprep.subr.mxu0 0.0
    %470 = vmatpush1.msra.mxu0 0.0
    %471 = vmatprep.subr.mxu0 0.0
    %472 = vmatpush1.msra.mxu0 0.0
    %473 = vmatprep.subr.mxu0 0.0
    %474 = vmatpush1.msra.mxu0 0.0
    %475 = vmatprep.subr.mxu0 0.0
    %476 = vmatpush1.msra.mxu0 0.0
    %477 = vmatprep.subr.mxu0 0.0
    %478 = vmatpush1.msra.mxu0 0.0
    %479 = vmatprep.subr.mxu0 0.0
    %480 = vmatpush1.msra.mxu0 0.0
    %481 = vmatprep.subr.mxu0 0.0
    %482 = vmatpush1.msra.mxu0 0.0
    %483 = vmatprep.subr.mxu0 0.0
    %484 = vmatpush1.msra.mxu0 0.0
    %485 = vmatprep.subr.mxu0 0.0
    %486 = vmatpush1.msra.mxu0 0.0
    %487 = vmatprep.subr.mxu0 0.0
    %488 = vmatpush1.msra.mxu0 0.0
    %489 = vmatprep.subr.mxu0 0.0
    %490 = vmatpush1.msra.mxu0 0.0
    %491 = vmatprep.subr.mxu0 0.0
    %492 = vmatpush1.msra.mxu0 0.0
    %493 = vmatprep.subr.mxu0 0.0
    %494 = vmatpush1.msra.mxu0 0.0
    %495 = vmatprep.subr.mxu0 0.0
    %496 = vmatpush1.msra.mxu0 0.0
    %497 = vmatprep.subr.mxu0 0.0
    %498 = vmatpush1.msra.mxu0 0.0
    %499 = vmatprep.subr.mxu0 0.0
    %500 = vmatpush1.msra.mxu0 0.0
    %501 = vmatprep.subr.mxu0 0.0
    %502 = vmatpush1.msra.mxu0 0.0
    %503 = vmatprep.subr.mxu0 0.0
    %504 = vmatpush1.msra.mxu0 0.0
    %505 = vmatprep.subr.mxu0 0.0
    %506 = vmatpush1.msra.mxu0 0.0
    %507 = vmatprep.subr.mxu0 0.0
    %508 = vmatpush1.msra.mxu0 0.0
    %509 = vmatprep.subr.mxu0 0.0
    %510 = vmatpush1.msra.mxu0 0.0
    %511 = vmatprep.subr.mxu0 0.0
    %512 = vmatpush1.msra.mxu0 0.0
    %513 = vmatprep.subr.mxu0 0.0
    %514 = vmatpush1.msra.mxu0 0.0
    %515 = vmatprep.mubr.f32.mxu0 0.0
    %516 = vmatmul.mubr.f32.gmra.mrb[0].mxu0 %v449
    %v517 = vpop.f32.mrb[0].mxu0
    %v518 = vadd.f32 0.0, %v517
    %v519 = vpop.f32.mrb[0].mxu0
    %520 = vdwg.mxu0
    %521 = vst.msk [vmem:[#allocation2] sm:$0xff] %vm191, %v442
    %522 = vst.msk [vmem:[#allocation2 + $0x8] sm:$0xff] %vm191, %v518
    %523 = vrot.lane.b32.xlu0 %v177, 120
    %v524 = vpop.permute.xlu0 %523
    %525 = vrot.lane.b32.xlu0 %v169, 88
    %v526 = vpop.permute.xlu0 %525
    %v527 = vsel %vm191, %v524, 0
    %v529 = vsel %vm191, %v526, 0
    %531 = vmatprep.subr.mxu0 0.0
    %532 = vmatpush1.xpose.msra.mxu0 %v529
    %533 = vmatprep.subr.mxu0 0.0
    %534 = vmatpush1.xpose.msra.mxu0 0.0
    %535 = vmatprep.subr.mxu0 0.0
    %536 = vmatpush1.xpose.msra.mxu0 0.0
    %537 = vmatprep.subr.mxu0 0.0
    %538 = vmatpush1.xpose.msra.mxu0 0.0
    %539 = vmatprep.subr.mxu0 0.0
    %540 = vmatpush1.xpose.msra.mxu0 0.0
    %541 = vmatprep.subr.mxu0 0.0
    %542 = vmatpush1.xpose.msra.mxu0 0.0
    %543 = vmatprep.subr.mxu0 0.0
    %544 = vmatpush1.xpose.msra.mxu0 0.0
    %545 = vmatprep.subr.mxu0 0.0
    %546 = vmatpush1.xpose.msra.mxu0 0.0
    %547 = vmatprep.subr.mxu0 0.0
    %548 = vmatpush1.xpose.msra.mxu0 0.0
    %549 = vmatprep.subr.mxu0 0.0
    %550 = vmatpush1.xpose.msra.mxu0 0.0
    %551 = vmatprep.subr.mxu0 0.0
    %552 = vmatpush1.xpose.msra.mxu0 0.0
    %553 = vmatprep.subr.mxu0 0.0
    %554 = vmatpush1.xpose.msra.mxu0 0.0
    %555 = vmatprep.subr.mxu0 0.0
    %556 = vmatpush1.xpose.msra.mxu0 0.0
    %557 = vmatprep.subr.mxu0 0.0
    %558 = vmatpush1.xpose.msra.mxu0 0.0
    %559 = vmatprep.subr.mxu0 0.0
    %560 = vmatpush1.xpose.msra.mxu0 0.0
    %561 = vmatprep.subr.mxu0 0.0
    %562 = vmatpush1.xpose.msra.mxu0 0.0
    %563 = vmatprep.subr.mxu0 0.0
    %564 = vmatpush1.xpose.msra.mxu0 0.0
    %565 = vmatprep.subr.mxu0 0.0
    %566 = vmatpush1.xpose.msra.mxu0 0.0
    %567 = vmatprep.subr.mxu0 0.0
    %568 = vmatpush1.xpose.msra.mxu0 0.0
    %569 = vmatprep.subr.mxu0 0.0
    %570 = vmatpush1.xpose.msra.mxu0 0.0
    %571 = vmatprep.subr.mxu0 0.0
    %572 = vmatpush1.xpose.msra.mxu0 0.0
    %573 = vmatprep.subr.mxu0 0.0
    %574 = vmatpush1.xpose.msra.mxu0 0.0
    %575 = vmatprep.subr.mxu0 0.0
    %576 = vmatpush1.xpose.msra.mxu0 0.0
    %577 = vmatprep.subr.mxu0 0.0
    %578 = vmatpush1.xpose.msra.mxu0 0.0
    %579 = vmatprep.subr.mxu0 0.0
    %580 = vmatpush1.xpose.msra.mxu0 0.0
    %581 = vmatprep.subr.mxu0 0.0
    %582 = vmatpush1.xpose.msra.mxu0 0.0
    %583 = vmatprep.subr.mxu0 0.0
    %584 = vmatpush1.xpose.msra.mxu0 0.0
    %585 = vmatprep.subr.mxu0 0.0
    %586 = vmatpush1.xpose.msra.mxu0 0.0
    %587 = vmatprep.subr.mxu0 0.0
    %588 = vmatpush1.xpose.msra.mxu0 0.0
    %589 = vmatprep.subr.mxu0 0.0
    %590 = vmatpush1.xpose.msra.mxu0 0.0
    %591 = vmatprep.subr.mxu0 0.0
    %592 = vmatpush1.xpose.msra.mxu0 0.0
    %593 = vmatprep.subr.mxu0 0.0
    %594 = vmatpush1.xpose.msra.mxu0 0.0
    %595 = vmatprep.mubr.f32.mxu0 0.0
    %596 = vmatmul.mubr.f32.gmra.mrb[0].mxu0 %v527
    %v597 = vpop.f32.mrb[0].mxu0
    %v598 = vadd.f32 0.0, %v597
    %v599 = vpop.f32.mrb[0].mxu0
    %600 = vdwg.mxu0
    %601 = vrot.lane.b32.xlu0 %v178, 120
    %v602 = vpop.permute.xlu0 %601
    %603 = vrot.lane.b32.xlu0 %v174, 88
    %v604 = vpop.permute.xlu0 %603
    %v605 = vsel %vm191, %v602, 0
    %v607 = vsel %vm191, %v604, 0
    %609 = vmatprep.subr.mxu0 0.0
    %610 = vmatpush1.xpose.msra.mxu0 %v607
    %611 = vmatprep.subr.mxu0 0.0
    %612 = vmatpush1.xpose.msra.mxu0 0.0
    %613 = vmatprep.subr.mxu0 0.0
    %614 = vmatpush1.xpose.msra.mxu0 0.0
    %615 = vmatprep.subr.mxu0 0.0
    %616 = vmatpush1.xpose.msra.mxu0 0.0
    %617 = vmatprep.subr.mxu0 0.0
    %618 = vmatpush1.xpose.msra.mxu0 0.0
    %619 = vmatprep.subr.mxu0 0.0
    %620 = vmatpush1.xpose.msra.mxu0 0.0
    %621 = vmatprep.subr.mxu0 0.0
    %622 = vmatpush1.xpose.msra.mxu0 0.0
    %623 = vmatprep.subr.mxu0 0.0
    %624 = vmatpush1.xpose.msra.mxu0 0.0
    %625 = vmatprep.subr.mxu0 0.0
    %626 = vmatpush1.xpose.msra.mxu0 0.0
    %627 = vmatprep.subr.mxu0 0.0
    %628 = vmatpush1.xpose.msra.mxu0 0.0
    %629 = vmatprep.subr.mxu0 0.0
    %630 = vmatpush1.xpose.msra.mxu0 0.0
    %631 = vmatprep.subr.mxu0 0.0
    %632 = vmatpush1.xpose.msra.mxu0 0.0
    %633 = vmatprep.subr.mxu0 0.0
    %634 = vmatpush1.xpose.msra.mxu0 0.0
    %635 = vmatprep.subr.mxu0 0.0
    %636 = vmatpush1.xpose.msra.mxu0 0.0
    %637 = vmatprep.subr.mxu0 0.0
    %638 = vmatpush1.xpose.msra.mxu0 0.0
    %639 = vmatprep.subr.mxu0 0.0
    %640 = vmatpush1.xpose.msra.mxu0 0.0
    %641 = vmatprep.subr.mxu0 0.0
    %642 = vmatpush1.xpose.msra.mxu0 0.0
    %643 = vmatprep.subr.mxu0 0.0
    %644 = vmatpush1.xpose.msra.mxu0 0.0
    %645 = vmatprep.subr.mxu0 0.0
    %646 = vmatpush1.xpose.msra.mxu0 0.0
    %647 = vmatprep.subr.mxu0 0.0
    %648 = vmatpush1.xpose.msra.mxu0 0.0
    %649 = vmatprep.subr.mxu0 0.0
    %650 = vmatpush1.xpose.msra.mxu0 0.0
    %651 = vmatprep.subr.mxu0 0.0
    %652 = vmatpush1.xpose.msra.mxu0 0.0
    %653 = vmatprep.subr.mxu0 0.0
    %654 = vmatpush1.xpose.msra.mxu0 0.0
    %655 = vmatprep.subr.mxu0 0.0
    %656 = vmatpush1.xpose.msra.mxu0 0.0
    %657 = vmatprep.subr.mxu0 0.0
    %658 = vmatpush1.xpose.msra.mxu0 0.0
    %659 = vmatprep.subr.mxu0 0.0
    %660 = vmatpush1.xpose.msra.mxu0 0.0
    %661 = vmatprep.subr.mxu0 0.0
    %662 = vmatpush1.xpose.msra.mxu0 0.0
    %663 = vmatprep.subr.mxu0 0.0
    %664 = vmatpush1.xpose.msra.mxu0 0.0
    %665 = vmatprep.subr.mxu0 0.0
    %666 = vmatpush1.xpose.msra.mxu0 0.0
    %667 = vmatprep.subr.mxu0 0.0
    %668 = vmatpush1.xpose.msra.mxu0 0.0
    %669 = vmatprep.subr.mxu0 0.0
    %670 = vmatpush1.xpose.msra.mxu0 0.0
    %671 = vmatprep.subr.mxu0 0.0
    %672 = vmatpush1.xpose.msra.mxu0 0.0
    %673 = vmatprep.mubr.f32.mxu0 0.0
    %674 = vmatmul.mubr.f32.gmra.mrb[0].mxu0 %v605
    %v675 = vpop.f32.mrb[0].mxu0
    %v676 = vadd.f32 0.0, %v675
    %v677 = vpop.f32.mrb[0].mxu0
    %678 = vdwg.mxu0
    %v679 = vsel %vm186, %v598, -1e+09
    %v680 = vsel %vm187, %v676, -1e+09
    %v681 = vsel %vm191, %v679, -inf
    %682 = vmax.xlane.f32.xlu0 %v681
    %v683 = vpop.xlane.xlu0 %682
    %v684 = vsel %vm191, %v680, -inf
    %685 = vmax.xlane.f32.xlu0 %v684
    %v686 = vpop.xlane.xlu0 %685
    %v687 = vsub.f32 %v679, %v683
    %v688 = vsub.f32 %v680, %v686
    %v689 = vmul.f32 %v687, 1.442695
    %v690 = vpow.pop %v689
    %v691 = vmul.f32 %v688, 1.442695
    %v692 = vpow.pop %v691
    %v693 = vsel %vm191, %v690, 0.0
    %694 = vadd.xlane.f32.xlu0 %v693
    %v695 = vpop.xlane.xlu0 %694
    %v696 = vsel %vm191, %v692, 0.0
    %697 = vadd.xlane.f32.xlu0 %v696
    %v698 = vpop.xlane.xlu0 %697
    %v699 = vrcp.pop %v695
    %v700 = vrcp.pop %v698
    %v701 = vmul.f32 %v690, %v699
    %v702 = vmul.f32 %v692, %v700
    %703 = vrot.lane.b32.xlu0 %v169, 56
    %v704 = vpop.permute.xlu0 %703
    %v707 = vsel %vm191, %v701, 0
    %709 = vmatprep.subr.mxu0 0.0
    %710 = vmatpush1.msra.mxu0 %v704
    %711 = vmatprep.subr.mxu0 0.0
    %712 = vmatpush1.msra.mxu0 0.0
    %713 = vmatprep.subr.mxu0 0.0
    %714 = vmatpush1.msra.mxu0 0.0
    %715 = vmatprep.subr.mxu0 0.0
    %716 = vmatpush1.msra.mxu0 0.0
    %717 = vmatprep.subr.mxu0 0.0
    %718 = vmatpush1.msra.mxu0 0.0
    %719 = vmatprep.subr.mxu0 0.0
    %720 = vmatpush1.msra.mxu0 0.0
    %721 = vmatprep.subr.mxu0 0.0
    %722 = vmatpush1.msra.mxu0 0.0
    %723 = vmatprep.subr.mxu0 0.0
    %724 = vmatpush1.msra.mxu0 0.0
    %725 = vmatprep.subr.mxu0 0.0
    %726 = vmatpush1.msra.mxu0 0.0
    %727 = vmatprep.subr.mxu0 0.0
    %728 = vmatpush1.msra.mxu0 0.0
    %729 = vmatprep.subr.mxu0 0.0
    %730 = vmatpush1.msra.mxu0 0.0
    %731 = vmatprep.subr.mxu0 0.0
    %732 = vmatpush1.msra.mxu0 0.0
    %733 = vmatprep.subr.mxu0 0.0
    %734 = vmatpush1.msra.mxu0 0.0
    %735 = vmatprep.subr.mxu0 0.0
    %736 = vmatpush1.msra.mxu0 0.0
    %737 = vmatprep.subr.mxu0 0.0
    %738 = vmatpush1.msra.mxu0 0.0
    %739 = vmatprep.subr.mxu0 0.0
    %740 = vmatpush1.msra.mxu0 0.0
    %741 = vmatprep.subr.mxu0 0.0
    %742 = vmatpush1.msra.mxu0 0.0
    %743 = vmatprep.subr.mxu0 0.0
    %744 = vmatpush1.msra.mxu0 0.0
    %745 = vmatprep.subr.mxu0 0.0
    %746 = vmatpush1.msra.mxu0 0.0
    %747 = vmatprep.subr.mxu0 0.0
    %748 = vmatpush1.msra.mxu0 0.0
    %749 = vmatprep.subr.mxu0 0.0
    %750 = vmatpush1.msra.mxu0 0.0
    %751 = vmatprep.subr.mxu0 0.0
    %752 = vmatpush1.msra.mxu0 0.0
    %753 = vmatprep.subr.mxu0 0.0
    %754 = vmatpush1.msra.mxu0 0.0
    %755 = vmatprep.subr.mxu0 0.0
    %756 = vmatpush1.msra.mxu0 0.0
    %757 = vmatprep.subr.mxu0 0.0
    %758 = vmatpush1.msra.mxu0 0.0
    %759 = vmatprep.subr.mxu0 0.0
    %760 = vmatpush1.msra.mxu0 0.0
    %761 = vmatprep.subr.mxu0 0.0
    %762 = vmatpush1.msra.mxu0 0.0
    %763 = vmatprep.subr.mxu0 0.0
    %764 = vmatpush1.msra.mxu0 0.0
    %765 = vmatprep.subr.mxu0 0.0
    %766 = vmatpush1.msra.mxu0 0.0
    %767 = vmatprep.subr.mxu0 0.0
    %768 = vmatpush1.msra.mxu0 0.0
    %769 = vmatprep.subr.mxu0 0.0
    %770 = vmatpush1.msra.mxu0 0.0
    %771 = vmatprep.subr.mxu0 0.0
    %772 = vmatpush1.msra.mxu0 0.0
    %773 = vmatprep.mubr.f32.mxu0 0.0
    %774 = vmatmul.mubr.f32.gmra.mrb[0].mxu0 %v707
    %v775 = vpop.f32.mrb[0].mxu0
    %v776 = vadd.f32 0.0, %v775
    %v777 = vpop.f32.mrb[0].mxu0
    %778 = vdwg.mxu0
    %779 = vrot.lane.b32.xlu0 %v174, 56
    %v780 = vpop.permute.xlu0 %779
    %v783 = vsel %vm191, %v702, 0
    %785 = vmatprep.subr.mxu0 0.0
    %786 = vmatpush1.msra.mxu0 %v780
    %787 = vmatprep.subr.mxu0 0.0
    %788 = vmatpush1.msra.mxu0 0.0
    %789 = vmatprep.subr.mxu0 0.0
    %790 = vmatpush1.msra.mxu0 0.0
    %791 = vmatprep.subr.mxu0 0.0
    %792 = vmatpush1.msra.mxu0 0.0
    %793 = vmatprep.subr.mxu0 0.0
    %794 = vmatpush1.msra.mxu0 0.0
    %795 = vmatprep.subr.mxu0 0.0
    %796 = vmatpush1.msra.mxu0 0.0
    %797 = vmatprep.subr.mxu0 0.0
    %798 = vmatpush1.msra.mxu0 0.0
    %799 = vmatprep.subr.mxu0 0.0
    %800 = vmatpush1.msra.mxu0 0.0
    %801 = vmatprep.subr.mxu0 0.0
    %802 = vmatpush1.msra.mxu0 0.0
    %803 = vmatprep.subr.mxu0 0.0
    %804 = vmatpush1.msra.mxu0 0.0
    %805 = vmatprep.subr.mxu0 0.0
    %806 = vmatpush1.msra.mxu0 0.0
    %807 = vmatprep.subr.mxu0 0.0
    %808 = vmatpush1.msra.mxu0 0.0
    %809 = vmatprep.subr.mxu0 0.0
    %810 = vmatpush1.msra.mxu0 0.0
    %811 = vmatprep.subr.mxu0 0.0
    %812 = vmatpush1.msra.mxu0 0.0
    %813 = vmatprep.subr.mxu0 0.0
    %814 = vmatpush1.msra.mxu0 0.0
    %815 = vmatprep.subr.mxu0 0.0
    %816 = vmatpush1.msra.mxu0 0.0
    %817 = vmatprep.subr.mxu0 0.0
    %818 = vmatpush1.msra.mxu0 0.0
    %819 = vmatprep.subr.mxu0 0.0
    %820 = vmatpush1.msra.mxu0 0.0
    %821 = vmatprep.subr.mxu0 0.0
    %822 = vmatpush1.msra.mxu0 0.0
    %823 = vmatprep.subr.mxu0 0.0
    %824 = vmatpush1.msra.mxu0 0.0
    %825 = vmatprep.subr.mxu0 0.0
    %826 = vmatpush1.msra.mxu0 0.0
    %827 = vmatprep.subr.mxu0 0.0
    %828 = vmatpush1.msra.mxu0 0.0
    %829 = vmatprep.subr.mxu0 0.0
    %830 = vmatpush1.msra.mxu0 0.0
    %831 = vmatprep.subr.mxu0 0.0
    %832 = vmatpush1.msra.mxu0 0.0
    %833 = vmatprep.subr.mxu0 0.0
    %834 = vmatpush1.msra.mxu0 0.0
    %835 = vmatprep.subr.mxu0 0.0
    %836 = vmatpush1.msra.mxu0 0.0
    %837 = vmatprep.subr.mxu0 0.0
    %838 = vmatpush1.msra.mxu0 0.0
    %839 = vmatprep.subr.mxu0 0.0
    %840 = vmatpush1.msra.mxu0 0.0
    %841 = vmatprep.subr.mxu0 0.0
    %842 = vmatpush1.msra.mxu0 0.0
    %843 = vmatprep.subr.mxu0 0.0
    %844 = vmatpush1.msra.mxu0 0.0
    %845 = vmatprep.subr.mxu0 0.0
    %846 = vmatpush1.msra.mxu0 0.0
    %847 = vmatprep.subr.mxu0 0.0
    %848 = vmatpush1.msra.mxu0 0.0
    %849 = vmatprep.mubr.f32.mxu0 0.0
    %850 = vmatmul.mubr.f32.gmra.mrb[0].mxu0 %v783
    %v851 = vpop.f32.mrb[0].mxu0
    %v852 = vadd.f32 0.0, %v851
    %v853 = vpop.f32.mrb[0].mxu0
    %854 = vdwg.mxu0
    %857 = vrot.lane.b32.xlu0 %v776, 8
    %v858 = vpop.permute.xlu0 %857
    %859 = vrot.lane.b32.xlu0 %v852, 8
    %v860 = vpop.permute.xlu0 %859
    %vm863 = vcmask 130112
    %864 = vst.msk [vmem:[#allocation2] sm:$0xff] %vm863, %v858
    %865 = vst.msk [vmem:[#allocation2 + $0x8] sm:$0xff] %vm863, %v860
    %866 = vrot.lane.b32.xlu0 %v177, 112
    %v867 = vpop.permute.xlu0 %866
    %868 = vrot.lane.b32.xlu0 %v169, 80
    %v869 = vpop.permute.xlu0 %868
    %v870 = vsel %vm191, %v867, 0
    %v872 = vsel %vm191, %v869, 0
    %874 = vmatprep.subr.mxu0 0.0
    %875 = vmatpush1.xpose.msra.mxu0 %v872
    %876 = vmatprep.subr.mxu0 0.0
    %877 = vmatpush1.xpose.msra.mxu0 0.0
    %878 = vmatprep.subr.mxu0 0.0
    %879 = vmatpush1.xpose.msra.mxu0 0.0
    %880 = vmatprep.subr.mxu0 0.0
    %881 = vmatpush1.xpose.msra.mxu0 0.0
    %882 = vmatprep.subr.mxu0 0.0
    %883 = vmatpush1.xpose.msra.mxu0 0.0
    %884 = vmatprep.subr.mxu0 0.0
    %885 = vmatpush1.xpose.msra.mxu0 0.0
    %886 = vmatprep.subr.mxu0 0.0
    %887 = vmatpush1.xpose.msra.mxu0 0.0
    %888 = vmatprep.subr.mxu0 0.0
    %889 = vmatpush1.xpose.msra.mxu0 0.0
    %890 = vmatprep.subr.mxu0 0.0
    %891 = vmatpush1.xpose.msra.mxu0 0.0
    %892 = vmatprep.subr.mxu0 0.0
    %893 = vmatpush1.xpose.msra.mxu0 0.0
    %894 = vmatprep.subr.mxu0 0.0
    %895 = vmatpush1.xpose.msra.mxu0 0.0
    %896 = vmatprep.subr.mxu0 0.0
    %897 = vmatpush1.xpose.msra.mxu0 0.0
    %898 = vmatprep.subr.mxu0 0.0
    %899 = vmatpush1.xpose.msra.mxu0 0.0
    %900 = vmatprep.subr.mxu0 0.0
    %901 = vmatpush1.xpose.msra.mxu0 0.0
    %902 = vmatprep.subr.mxu0 0.0
    %903 = vmatpush1.xpose.msra.mxu0 0.0
    %904 = vmatprep.subr.mxu0 0.0
    %905 = vmatpush1.xpose.msra.mxu0 0.0
    %906 = vmatprep.subr.mxu0 0.0
    %907 = vmatpush1.xpose.msra.mxu0 0.0
    %908 = vmatprep.subr.mxu0 0.0
    %909 = vmatpush1.xpose.msra.mxu0 0.0
    %910 = vmatprep.subr.mxu0 0.0
    %911 = vmatpush1.xpose.msra.mxu0 0.0
    %912 = vmatprep.subr.mxu0 0.0
    %913 = vmatpush1.xpose.msra.mxu0 0.0
    %914 = vmatprep.subr.mxu0 0.0
    %915 = vmatpush1.xpose.msra.mxu0 0.0
    %916 = vmatprep.subr.mxu0 0.0
    %917 = vmatpush1.xpose.msra.mxu0 0.0
    %918 = vmatprep.subr.mxu0 0.0
    %919 = vmatpush1.xpose.msra.mxu0 0.0
    %920 = vmatprep.subr.mxu0 0.0
    %921 = vmatpush1.xpose.msra.mxu0 0.0
    %922 = vmatprep.subr.mxu0 0.0
    %923 = vmatpush1.xpose.msra.mxu0 0.0
    %924 = vmatprep.subr.mxu0 0.0
    %925 = vmatpush1.xpose.msra.mxu0 0.0
    %926 = vmatprep.subr.mxu0 0.0
    %927 = vmatpush1.xpose.msra.mxu0 0.0
    %928 = vmatprep.subr.mxu0 0.0
    %929 = vmatpush1.xpose.msra.mxu0 0.0
    %930 = vmatprep.subr.mxu0 0.0
    %931 = vmatpush1.xpose.msra.mxu0 0.0
    %932 = vmatprep.subr.mxu0 0.0
    %933 = vmatpush1.xpose.msra.mxu0 0.0
    %934 = vmatprep.subr.mxu0 0.0
    %935 = vmatpush1.xpose.msra.mxu0 0.0
    %936 = vmatprep.subr.mxu0 0.0
    %937 = vmatpush1.xpose.msra.mxu0 0.0
    %938 = vmatprep.mubr.f32.mxu0 0.0
    %939 = vmatmul.mubr.f32.gmra.mrb[0].mxu0 %v870
    %v940 = vpop.f32.mrb[0].mxu0
    %v941 = vadd.f32 0.0, %v940
    %v942 = vpop.f32.mrb[0].mxu0
    %943 = vdwg.mxu0
    %944 = vrot.lane.b32.xlu0 %v178, 112
    %v945 = vpop.permute.xlu0 %944
    %946 = vrot.lane.b32.xlu0 %v174, 80
    %v947 = vpop.permute.xlu0 %946
    %v948 = vsel %vm191, %v945, 0
    %v950 = vsel %vm191, %v947, 0
    %952 = vmatprep.subr.mxu0 0.0
    %953 = vmatpush1.xpose.msra.mxu0 %v950
    %954 = vmatprep.subr.mxu0 0.0
    %955 = vmatpush1.xpose.msra.mxu0 0.0
    %956 = vmatprep.subr.mxu0 0.0
    %957 = vmatpush1.xpose.msra.mxu0 0.0
    %958 = vmatprep.subr.mxu0 0.0
    %959 = vmatpush1.xpose.msra.mxu0 0.0
    %960 = vmatprep.subr.mxu0 0.0
    %961 = vmatpush1.xpose.msra.mxu0 0.0
    %962 = vmatprep.subr.mxu0 0.0
    %963 = vmatpush1.xpose.msra.mxu0 0.0
    %964 = vmatprep.subr.mxu0 0.0
    %965 = vmatpush1.xpose.msra.mxu0 0.0
    %966 = vmatprep.subr.mxu0 0.0
    %967 = vmatpush1.xpose.msra.mxu0 0.0
    %968 = vmatprep.subr.mxu0 0.0
    %969 = vmatpush1.xpose.msra.mxu0 0.0
    %970 = vmatprep.subr.mxu0 0.0
    %971 = vmatpush1.xpose.msra.mxu0 0.0
    %972 = vmatprep.subr.mxu0 0.0
    %973 = vmatpush1.xpose.msra.mxu0 0.0
    %974 = vmatprep.subr.mxu0 0.0
    %975 = vmatpush1.xpose.msra.mxu0 0.0
    %976 = vmatprep.subr.mxu0 0.0
    %977 = vmatpush1.xpose.msra.mxu0 0.0
    %978 = vmatprep.subr.mxu0 0.0
    %979 = vmatpush1.xpose.msra.mxu0 0.0
    %980 = vmatprep.subr.mxu0 0.0
    %981 = vmatpush1.xpose.msra.mxu0 0.0
    %982 = vmatprep.subr.mxu0 0.0
    %983 = vmatpush1.xpose.msra.mxu0 0.0
    %984 = vmatprep.subr.mxu0 0.0
    %985 = vmatpush1.xpose.msra.mxu0 0.0
    %986 = vmatprep.subr.mxu0 0.0
    %987 = vmatpush1.xpose.msra.mxu0 0.0
    %988 = vmatprep.subr.mxu0 0.0
    %989 = vmatpush1.xpose.msra.mxu0 0.0
    %990 = vmatprep.subr.mxu0 0.0
    %991 = vmatpush1.xpose.msra.mxu0 0.0
    %992 = vmatprep.subr.mxu0 0.0
    %993 = vmatpush1.xpose.msra.mxu0 0.0
    %994 = vmatprep.subr.mxu0 0.0
    %995 = vmatpush1.xpose.msra.mxu0 0.0
    %996 = vmatprep.subr.mxu0 0.0
    %997 = vmatpush1.xpose.msra.mxu0 0.0
    %998 = vmatprep.subr.mxu0 0.0
    %999 = vmatpush1.xpose.msra.mxu0 0.0
    %1000 = vmatprep.subr.mxu0 0.0
    %1001 = vmatpush1.xpose.msra.mxu0 0.0
    %1002 = vmatprep.subr.mxu0 0.0
    %1003 = vmatpush1.xpose.msra.mxu0 0.0
    %1004 = vmatprep.subr.mxu0 0.0
    %1005 = vmatpush1.xpose.msra.mxu0 0.0
    %1006 = vmatprep.subr.mxu0 0.0
    %1007 = vmatpush1.xpose.msra.mxu0 0.0
    %1008 = vmatprep.subr.mxu0 0.0
    %1009 = vmatpush1.xpose.msra.mxu0 0.0
    %1010 = vmatprep.subr.mxu0 0.0
    %1011 = vmatpush1.xpose.msra.mxu0 0.0
    %1012 = vmatprep.subr.mxu0 0.0
    %1013 = vmatpush1.xpose.msra.mxu0 0.0
    %1014 = vmatprep.subr.mxu0 0.0
    %1015 = vmatpush1.xpose.msra.mxu0 0.0
    %1016 = vmatprep.mubr.f32.mxu0 0.0
    %1017 = vmatmul.mubr.f32.gmra.mrb[0].mxu0 %v948
    %v1018 = vpop.f32.mrb[0].mxu0
    %v1019 = vadd.f32 0.0, %v1018
    %v1020 = vpop.f32.mrb[0].mxu0
    %1021 = vdwg.mxu0
    %v1022 = vsel %vm186, %v941, -1e+09
    %v1023 = vsel %vm187, %v1019, -1e+09
    %v1024 = vsel %vm191, %v1022, -inf
    %1025 = vmax.xlane.f32.xlu0 %v1024
    %v1026 = vpop.xlane.xlu0 %1025
    %v1027 = vsel %vm191, %v1023, -inf
    %1028 = vmax.xlane.f32.xlu0 %v1027
    %v1029 = vpop.xlane.xlu0 %1028
    %v1030 = vsub.f32 %v1022, %v1026
    %v1031 = vsub.f32 %v1023, %v1029
    %v1032 = vmul.f32 %v1030, 1.442695
    %v1033 = vpow.pop %v1032
    %v1034 = vmul.f32 %v1031, 1.442695
    %v1035 = vpow.pop %v1034
    %v1036 = vsel %vm191, %v1033, 0.0
    %1037 = vadd.xlane.f32.xlu0 %v1036
    %v1038 = vpop.xlane.xlu0 %1037
    %v1039 = vsel %vm191, %v1035, 0.0
    %1040 = vadd.xlane.f32.xlu0 %v1039
    %v1041 = vpop.xlane.xlu0 %1040
    %v1042 = vrcp.pop %v1038
    %v1043 = vrcp.pop %v1041
    %v1044 = vmul.f32 %v1033, %v1042
    %v1045 = vmul.f32 %v1035, %v1043
    %1046 = vrot.lane.b32.xlu0 %v169, 48
    %v1047 = vpop.permute.xlu0 %1046
    %v1050 = vsel %vm191, %v1044, 0
    %1052 = vmatprep.subr.mxu0 0.0
    %1053 = vmatpush1.msra.mxu0 %v1047
    %1054 = vmatprep.subr.mxu0 0.0
    %1055 = vmatpush1.msra.mxu0 0.0
    %1056 = vmatprep.subr.mxu0 0.0
    %1057 = vmatpush1.msra.mxu0 0.0
    %1058 = vmatprep.subr.mxu0 0.0
    %1059 = vmatpush1.msra.mxu0 0.0
    %1060 = vmatprep.subr.mxu0 0.0
    %1061 = vmatpush1.msra.mxu0 0.0
    %1062 = vmatprep.subr.mxu0 0.0
    %1063 = vmatpush1.msra.mxu0 0.0
    %1064 = vmatprep.subr.mxu0 0.0
    %1065 = vmatpush1.msra.mxu0 0.0
    %1066 = vmatprep.subr.mxu0 0.0
    %1067 = vmatpush1.msra.mxu0 0.0
    %1068 = vmatprep.subr.mxu0 0.0
    %1069 = vmatpush1.msra.mxu0 0.0
    %1070 = vmatprep.subr.mxu0 0.0
    %1071 = vmatpush1.msra.mxu0 0.0
    %1072 = vmatprep.subr.mxu0 0.0
    %1073 = vmatpush1.msra.mxu0 0.0
    %1074 = vmatprep.subr.mxu0 0.0
    %1075 = vmatpush1.msra.mxu0 0.0
    %1076 = vmatprep.subr.mxu0 0.0
    %1077 = vmatpush1.msra.mxu0 0.0
    %1078 = vmatprep.subr.mxu0 0.0
    %1079 = vmatpush1.msra.mxu0 0.0
    %1080 = vmatprep.subr.mxu0 0.0
    %1081 = vmatpush1.msra.mxu0 0.0
    %1082 = vmatprep.subr.mxu0 0.0
    %1083 = vmatpush1.msra.mxu0 0.0
    %1084 = vmatprep.subr.mxu0 0.0
    %1085 = vmatpush1.msra.mxu0 0.0
    %1086 = vmatprep.subr.mxu0 0.0
    %1087 = vmatpush1.msra.mxu0 0.0
    %1088 = vmatprep.subr.mxu0 0.0
    %1089 = vmatpush1.msra.mxu0 0.0
    %1090 = vmatprep.subr.mxu0 0.0
    %1091 = vmatpush1.msra.mxu0 0.0
    %1092 = vmatprep.subr.mxu0 0.0
    %1093 = vmatpush1.msra.mxu0 0.0
    %1094 = vmatprep.subr.mxu0 0.0
    %1095 = vmatpush1.msra.mxu0 0.0
    %1096 = vmatprep.subr.mxu0 0.0
    %1097 = vmatpush1.msra.mxu0 0.0
    %1098 = vmatprep.subr.mxu0 0.0
    %1099 = vmatpush1.msra.mxu0 0.0
    %1100 = vmatprep.subr.mxu0 0.0
    %1101 = vmatpush1.msra.mxu0 0.0
    %1102 = vmatprep.subr.mxu0 0.0
    %1103 = vmatpush1.msra.mxu0 0.0
    %1104 = vmatprep.subr.mxu0 0.0
    %1105 = vmatpush1.msra.mxu0 0.0
    %1106 = vmatprep.subr.mxu0 0.0
    %1107 = vmatpush1.msra.mxu0 0.0
    %1108 = vmatprep.subr.mxu0 0.0
    %1109 = vmatpush1.msra.mxu0 0.0
    %1110 = vmatprep.subr.mxu0 0.0
    %1111 = vmatpush1.msra.mxu0 0.0
    %1112 = vmatprep.subr.mxu0 0.0
    %1113 = vmatpush1.msra.mxu0 0.0
    %1114 = vmatprep.subr.mxu0 0.0
    %1115 = vmatpush1.msra.mxu0 0.0
    %1116 = vmatprep.mubr.f32.mxu0 0.0
    %1117 = vmatmul.mubr.f32.gmra.mrb[0].mxu0 %v1050
    %v1118 = vpop.f32.mrb[0].mxu0
    %v1119 = vadd.f32 0.0, %v1118
    %v1120 = vpop.f32.mrb[0].mxu0
    %1121 = vdwg.mxu0
    %1122 = vrot.lane.b32.xlu0 %v174, 48
    %v1123 = vpop.permute.xlu0 %1122
    %v1126 = vsel %vm191, %v1045, 0
    %1128 = vmatprep.subr.mxu0 0.0
    %1129 = vmatpush1.msra.mxu0 %v1123
    %1130 = vmatprep.subr.mxu0 0.0
    %1131 = vmatpush1.msra.mxu0 0.0
    %1132 = vmatprep.subr.mxu0 0.0
    %1133 = vmatpush1.msra.mxu0 0.0
    %1134 = vmatprep.subr.mxu0 0.0
    %1135 = vmatpush1.msra.mxu0 0.0
    %1136 = vmatprep.subr.mxu0 0.0
    %1137 = vmatpush1.msra.mxu0 0.0
    %1138 = vmatprep.subr.mxu0 0.0
    %1139 = vmatpush1.msra.mxu0 0.0
    %1140 = vmatprep.subr.mxu0 0.0
    %1141 = vmatpush1.msra.mxu0 0.0
    %1142 = vmatprep.subr.mxu0 0.0
    %1143 = vmatpush1.msra.mxu0 0.0
    %1144 = vmatprep.subr.mxu0 0.0
    %1145 = vmatpush1.msra.mxu0 0.0
    %1146 = vmatprep.subr.mxu0 0.0
    %1147 = vmatpush1.msra.mxu0 0.0
    %1148 = vmatprep.subr.mxu0 0.0
    %1149 = vmatpush1.msra.mxu0 0.0
    %1150 = vmatprep.subr.mxu0 0.0
    %1151 = vmatpush1.msra.mxu0 0.0
    %1152 = vmatprep.subr.mxu0 0.0
    %1153 = vmatpush1.msra.mxu0 0.0
    %1154 = vmatprep.subr.mxu0 0.0
    %1155 = vmatpush1.msra.mxu0 0.0
    %1156 = vmatprep.subr.mxu0 0.0
    %1157 = vmatpush1.msra.mxu0 0.0
    %1158 = vmatprep.subr.mxu0 0.0
    %1159 = vmatpush1.msra.mxu0 0.0
    %1160 = vmatprep.subr.mxu0 0.0
    %1161 = vmatpush1.msra.mxu0 0.0
    %1162 = vmatprep.subr.mxu0 0.0
    %1163 = vmatpush1.msra.mxu0 0.0
    %1164 = vmatprep.subr.mxu0 0.0
    %1165 = vmatpush1.msra.mxu0 0.0
    %1166 = vmatprep.subr.mxu0 0.0
    %1167 = vmatpush1.msra.mxu0 0.0
    %1168 = vmatprep.subr.mxu0 0.0
    %1169 = vmatpush1.msra.mxu0 0.0
    %1170 = vmatprep.subr.mxu0 0.0
    %1171 = vmatpush1.msra.mxu0 0.0
    %1172 = vmatprep.subr.mxu0 0.0
    %1173 = vmatpush1.msra.mxu0 0.0
    %1174 = vmatprep.subr.mxu0 0.0
    %1175 = vmatpush1.msra.mxu0 0.0
    %1176 = vmatprep.subr.mxu0 0.0
    %1177 = vmatpush1.msra.mxu0 0.0
    %1178 = vmatprep.subr.mxu0 0.0
    %1179 = vmatpush1.msra.mxu0 0.0
    %1180 = vmatprep.subr.mxu0 0.0
    %1181 = vmatpush1.msra.mxu0 0.0
    %1182 = vmatprep.subr.mxu0 0.0
    %1183 = vmatpush1.msra.mxu0 0.0
    %1184 = vmatprep.subr.mxu0 0.0
    %1185 = vmatpush1.msra.mxu0 0.0
    %1186 = vmatprep.subr.mxu0 0.0
    %1187 = vmatpush1.msra.mxu0 0.0
    %1188 = vmatprep.subr.mxu0 0.0
    %1189 = vmatpush1.msra.mxu0 0.0
    %1190 = vmatprep.subr.mxu0 0.0
    %1191 = vmatpush1.msra.mxu0 0.0
    %1192 = vmatprep.mubr.f32.mxu0 0.0
    %1193 = vmatmul.mubr.f32.gmra.mrb[0].mxu0 %v1126
    %v1194 = vpop.f32.mrb[0].mxu0
    %v1195 = vadd.f32 0.0, %v1194
    %v1196 = vpop.f32.mrb[0].mxu0
    %1197 = vdwg.mxu0
    %1200 = vrot.lane.b32.xlu0 %v1119, 16
    %v1201 = vpop.permute.xlu0 %1200
    %1202 = vrot.lane.b32.xlu0 %v1195, 16
    %v1203 = vpop.permute.xlu0 %1202
    %vm1206 = vcmask 195712
    %1207 = vst.msk [vmem:[#allocation2] sm:$0xff] %vm1206, %v1201
    %1208 = vst.msk [vmem:[#allocation2 + $0x8] sm:$0xff] %vm1206, %v1203
    %1209 = vrot.lane.b32.xlu0 %v177, 104
    %v1210 = vpop.permute.xlu0 %1209
    %1211 = vrot.lane.b32.xlu0 %v169, 72
    %v1212 = vpop.permute.xlu0 %1211
    %v1213 = vsel %vm191, %v1210, 0
    %v1215 = vsel %vm191, %v1212, 0
    %1217 = vmatprep.subr.mxu0 0.0
    %1218 = vmatpush1.xpose.msra.mxu0 %v1215
    %1219 = vmatprep.subr.mxu0 0.0
    %1220 = vmatpush1.xpose.msra.mxu0 0.0
    %1221 = vmatprep.subr.mxu0 0.0
    %1222 = vmatpush1.xpose.msra.mxu0 0.0
    %1223 = vmatprep.subr.mxu0 0.0
    %1224 = vmatpush1.xpose.msra.mxu0 0.0
    %1225 = vmatprep.subr.mxu0 0.0
    %1226 = vmatpush1.xpose.msra.mxu0 0.0
    %1227 = vmatprep.subr.mxu0 0.0
    %1228 = vmatpush1.xpose.msra.mxu0 0.0
    %1229 = vmatprep.subr.mxu0 0.0
    %1230 = vmatpush1.xpose.msra.mxu0 0.0
    %1231 = vmatprep.subr.mxu0 0.0
    %1232 = vmatpush1.xpose.msra.mxu0 0.0
    %1233 = vmatprep.subr.mxu0 0.0
    %1234 = vmatpush1.xpose.msra.mxu0 0.0
    %1235 = vmatprep.subr.mxu0 0.0
    %1236 = vmatpush1.xpose.msra.mxu0 0.0
    %1237 = vmatprep.subr.mxu0 0.0
    %1238 = vmatpush1.xpose.msra.mxu0 0.0
    %1239 = vmatprep.subr.mxu0 0.0
    %1240 = vmatpush1.xpose.msra.mxu0 0.0
    %1241 = vmatprep.subr.mxu0 0.0
    %1242 = vmatpush1.xpose.msra.mxu0 0.0
    %1243 = vmatprep.subr.mxu0 0.0
    %1244 = vmatpush1.xpose.msra.mxu0 0.0
    %1245 = vmatprep.subr.mxu0 0.0
    %1246 = vmatpush1.xpose.msra.mxu0 0.0
    %1247 = vmatprep.subr.mxu0 0.0
    %1248 = vmatpush1.xpose.msra.mxu0 0.0
    %1249 = vmatprep.subr.mxu0 0.0
    %1250 = vmatpush1.xpose.msra.mxu0 0.0
    %1251 = vmatprep.subr.mxu0 0.0
    %1252 = vmatpush1.xpose.msra.mxu0 0.0
    %1253 = vmatprep.subr.mxu0 0.0
    %1254 = vmatpush1.xpose.msra.mxu0 0.0
    %1255 = vmatprep.subr.mxu0 0.0
    %1256 = vmatpush1.xpose.msra.mxu0 0.0
    %1257 = vmatprep.subr.mxu0 0.0
    %1258 = vmatpush1.xpose.msra.mxu0 0.0
    %1259 = vmatprep.subr.mxu0 0.0
    %1260 = vmatpush1.xpose.msra.mxu0 0.0
    %1261 = vmatprep.subr.mxu0 0.0
    %1262 = vmatpush1.xpose.msra.mxu0 0.0
    %1263 = vmatprep.subr.mxu0 0.0
    %1264 = vmatpush1.xpose.msra.mxu0 0.0
    %1265 = vmatprep.subr.mxu0 0.0
    %1266 = vmatpush1.xpose.msra.mxu0 0.0
    %1267 = vmatprep.subr.mxu0 0.0
    %1268 = vmatpush1.xpose.msra.mxu0 0.0
    %1269 = vmatprep.subr.mxu0 0.0
    %1270 = vmatpush1.xpose.msra.mxu0 0.0
    %1271 = vmatprep.subr.mxu0 0.0
    %1272 = vmatpush1.xpose.msra.mxu0 0.0
    %1273 = vmatprep.subr.mxu0 0.0
    %1274 = vmatpush1.xpose.msra.mxu0 0.0
    %1275 = vmatprep.subr.mxu0 0.0
    %1276 = vmatpush1.xpose.msra.mxu0 0.0
    %1277 = vmatprep.subr.mxu0 0.0
    %1278 = vmatpush1.xpose.msra.mxu0 0.0
    %1279 = vmatprep.subr.mxu0 0.0
    %1280 = vmatpush1.xpose.msra.mxu0 0.0
    %1281 = vmatprep.mubr.f32.mxu0 0.0
    %1282 = vmatmul.mubr.f32.gmra.mrb[0].mxu0 %v1213
    %v1283 = vpop.f32.mrb[0].mxu0
    %v1284 = vadd.f32 0.0, %v1283
    %v1285 = vpop.f32.mrb[0].mxu0
    %1286 = vdwg.mxu0
    %1287 = vrot.lane.b32.xlu0 %v178, 104
    %v1288 = vpop.permute.xlu0 %1287
    %1289 = vrot.lane.b32.xlu0 %v174, 72
    %v1290 = vpop.permute.xlu0 %1289
    %v1291 = vsel %vm191, %v1288, 0
    %v1293 = vsel %vm191, %v1290, 0
    %1295 = vmatprep.subr.mxu0 0.0
    %1296 = vmatpush1.xpose.msra.mxu0 %v1293
    %1297 = vmatprep.subr.mxu0 0.0
    %1298 = vmatpush1.xpose.msra.mxu0 0.0
    %1299 = vmatprep.subr.mxu0 0.0
    %1300 = vmatpush1.xpose.msra.mxu0 0.0
    %1301 = vmatprep.subr.mxu0 0.0
    %1302 = vmatpush1.xpose.msra.mxu0 0.0
    %1303 = vmatprep.subr.mxu0 0.0
    %1304 = vmatpush1.xpose.msra.mxu0 0.0
    %1305 = vmatprep.subr.mxu0 0.0
    %1306 = vmatpush1.xpose.msra.mxu0 0.0
    %1307 = vmatprep.subr.mxu0 0.0
    %1308 = vmatpush1.xpose.msra.mxu0 0.0
    %1309 = vmatprep.subr.mxu0 0.0
    %1310 = vmatpush1.xpose.msra.mxu0 0.0
    %1311 = vmatprep.subr.mxu0 0.0
    %1312 = vmatpush1.xpose.msra.mxu0 0.0
    %1313 = vmatprep.subr.mxu0 0.0
    %1314 = vmatpush1.xpose.msra.mxu0 0.0
    %1315 = vmatprep.subr.mxu0 0.0
    %1316 = vmatpush1.xpose.msra.mxu0 0.0
    %1317 = vmatprep.subr.mxu0 0.0
    %1318 = vmatpush1.xpose.msra.mxu0 0.0
    %1319 = vmatprep.subr.mxu0 0.0
    %1320 = vmatpush1.xpose.msra.mxu0 0.0
    %1321 = vmatprep.subr.mxu0 0.0
    %1322 = vmatpush1.xpose.msra.mxu0 0.0
    %1323 = vmatprep.subr.mxu0 0.0
    %1324 = vmatpush1.xpose.msra.mxu0 0.0
    %1325 = vmatprep.subr.mxu0 0.0
    %1326 = vmatpush1.xpose.msra.mxu0 0.0
    %1327 = vmatprep.subr.mxu0 0.0
    %1328 = vmatpush1.xpose.msra.mxu0 0.0
    %1329 = vmatprep.subr.mxu0 0.0
    %1330 = vmatpush1.xpose.msra.mxu0 0.0
    %1331 = vmatprep.subr.mxu0 0.0
    %1332 = vmatpush1.xpose.msra.mxu0 0.0
    %1333 = vmatprep.subr.mxu0 0.0
    %1334 = vmatpush1.xpose.msra.mxu0 0.0
    %1335 = vmatprep.subr.mxu0 0.0
    %1336 = vmatpush1.xpose.msra.mxu0 0.0
    %1337 = vmatprep.subr.mxu0 0.0
    %1338 = vmatpush1.xpose.msra.mxu0 0.0
    %1339 = vmatprep.subr.mxu0 0.0
    %1340 = vmatpush1.xpose.msra.mxu0 0.0
    %1341 = vmatprep.subr.mxu0 0.0
    %1342 = vmatpush1.xpose.msra.mxu0 0.0
    %1343 = vmatprep.subr.mxu0 0.0
    %1344 = vmatpush1.xpose.msra.mxu0 0.0
    %1345 = vmatprep.subr.mxu0 0.0
    %1346 = vmatpush1.xpose.msra.mxu0 0.0
    %1347 = vmatprep.subr.mxu0 0.0
    %1348 = vmatpush1.xpose.msra.mxu0 0.0
    %1349 = vmatprep.subr.mxu0 0.0
    %1350 = vmatpush1.xpose.msra.mxu0 0.0
    %1351 = vmatprep.subr.mxu0 0.0
    %1352 = vmatpush1.xpose.msra.mxu0 0.0
    %1353 = vmatprep.subr.mxu0 0.0
    %1354 = vmatpush1.xpose.msra.mxu0 0.0
    %1355 = vmatprep.subr.mxu0 0.0
    %1356 = vmatpush1.xpose.msra.mxu0 0.0
    %1357 = vmatprep.subr.mxu0 0.0
    %1358 = vmatpush1.xpose.msra.mxu0 0.0
    %1359 = vmatprep.mubr.f32.mxu0 0.0
    %1360 = vmatmul.mubr.f32.gmra.mrb[0].mxu0 %v1291
    %v1361 = vpop.f32.mrb[0].mxu0
    %v1362 = vadd.f32 0.0, %v1361
    %v1363 = vpop.f32.mrb[0].mxu0
    %1364 = vdwg.mxu0
    %v1365 = vsel %vm186, %v1284, -1e+09
    %v1366 = vsel %vm187, %v1362, -1e+09
    %v1367 = vsel %vm191, %v1365, -inf
    %1368 = vmax.xlane.f32.xlu0 %v1367
    %v1369 = vpop.xlane.xlu0 %1368
    %v1370 = vsel %vm191, %v1366, -inf
    %1371 = vmax.xlane.f32.xlu0 %v1370
    %v1372 = vpop.xlane.xlu0 %1371
    %v1373 = vsub.f32 %v1365, %v1369
    %v1374 = vsub.f32 %v1366, %v1372
    %v1375 = vmul.f32 %v1373, 1.442695
    %v1376 = vpow.pop %v1375
    %v1377 = vmul.f32 %v1374, 1.442695
    %v1378 = vpow.pop %v1377
    %v1379 = vsel %vm191, %v1376, 0.0
    %1380 = vadd.xlane.f32.xlu0 %v1379
    %v1381 = vpop.xlane.xlu0 %1380
    %v1382 = vsel %vm191, %v1378, 0.0
    %1383 = vadd.xlane.f32.xlu0 %v1382
    %v1384 = vpop.xlane.xlu0 %1383
    %v1385 = vrcp.pop %v1381
    %v1386 = vrcp.pop %v1384
    %v1387 = vmul.f32 %v1376, %v1385
    %v1388 = vmul.f32 %v1378, %v1386
    %1389 = vrot.lane.b32.xlu0 %v169, 40
    %v1390 = vpop.permute.xlu0 %1389
    %v1393 = vsel %vm191, %v1387, 0
    %1395 = vmatprep.subr.mxu0 0.0
    %1396 = vmatpush1.msra.mxu0 %v1390
    %1397 = vmatprep.subr.mxu0 0.0
    %1398 = vmatpush1.msra.mxu0 0.0
    %1399 = vmatprep.subr.mxu0 0.0
    %1400 = vmatpush1.msra.mxu0 0.0
    %1401 = vmatprep.subr.mxu0 0.0
    %1402 = vmatpush1.msra.mxu0 0.0
    %1403 = vmatprep.subr.mxu0 0.0
    %1404 = vmatpush1.msra.mxu0 0.0
    %1405 = vmatprep.subr.mxu0 0.0
    %1406 = vmatpush1.msra.mxu0 0.0
    %1407 = vmatprep.subr.mxu0 0.0
    %1408 = vmatpush1.msra.mxu0 0.0
    %1409 = vmatprep.subr.mxu0 0.0
    %1410 = vmatpush1.msra.mxu0 0.0
    %1411 = vmatprep.subr.mxu0 0.0
    %1412 = vmatpush1.msra.mxu0 0.0
    %1413 = vmatprep.subr.mxu0 0.0
    %1414 = vmatpush1.msra.mxu0 0.0
    %1415 = vmatprep.subr.mxu0 0.0
    %1416 = vmatpush1.msra.mxu0 0.0
    %1417 = vmatprep.subr.mxu0 0.0
    %1418 = vmatpush1.msra.mxu0 0.0
    %1419 = vmatprep.subr.mxu0 0.0
    %1420 = vmatpush1.msra.mxu0 0.0
    %1421 = vmatprep.subr.mxu0 0.0
    %1422 = vmatpush1.msra.mxu0 0.0
    %1423 = vmatprep.subr.mxu0 0.0
    %1424 = vmatpush1.msra.mxu0 0.0
    %1425 = vmatprep.subr.mxu0 0.0
    %1426 = vmatpush1.msra.mxu0 0.0
    %1427 = vmatprep.subr.mxu0 0.0
    %1428 = vmatpush1.msra.mxu0 0.0
    %1429 = vmatprep.subr.mxu0 0.0
    %1430 = vmatpush1.msra.mxu0 0.0
    %1431 = vmatprep.subr.mxu0 0.0
    %1432 = vmatpush1.msra.mxu0 0.0
    %1433 = vmatprep.subr.mxu0 0.0
    %1434 = vmatpush1.msra.mxu0 0.0
    %1435 = vmatprep.subr.mxu0 0.0
    %1436 = vmatpush1.msra.mxu0 0.0
    %1437 = vmatprep.subr.mxu0 0.0
    %1438 = vmatpush1.msra.mxu0 0.0
    %1439 = vmatprep.subr.mxu0 0.0
    %1440 = vmatpush1.msra.mxu0 0.0
    %1441 = vmatprep.subr.mxu0 0.0
    %1442 = vmatpush1.msra.mxu0 0.0
    %1443 = vmatprep.subr.mxu0 0.0
    %1444 = vmatpush1.msra.mxu0 0.0
    %1445 = vmatprep.subr.mxu0 0.0
    %1446 = vmatpush1.msra.mxu0 0.0
    %1447 = vmatprep.subr.mxu0 0.0
    %1448 = vmatpush1.msra.mxu0 0.0
    %1449 = vmatprep.subr.mxu0 0.0
    %1450 = vmatpush1.msra.mxu0 0.0
    %1451 = vmatprep.subr.mxu0 0.0
    %1452 = vmatpush1.msra.mxu0 0.0
    %1453 = vmatprep.subr.mxu0 0.0
    %1454 = vmatpush1.msra.mxu0 0.0
    %1455 = vmatprep.subr.mxu0 0.0
    %1456 = vmatpush1.msra.mxu0 0.0
    %1457 = vmatprep.subr.mxu0 0.0
    %1458 = vmatpush1.msra.mxu0 0.0
    %1459 = vmatprep.mubr.f32.mxu0 0.0
    %1460 = vmatmul.mubr.f32.gmra.mrb[0].mxu0 %v1393
    %v1461 = vpop.f32.mrb[0].mxu0
    %v1462 = vadd.f32 0.0, %v1461
    %v1463 = vpop.f32.mrb[0].mxu0
    %1464 = vdwg.mxu0
    %1465 = vrot.lane.b32.xlu0 %v174, 40
    %v1466 = vpop.permute.xlu0 %1465
    %v1469 = vsel %vm191, %v1388, 0
    %1471 = vmatprep.subr.mxu0 0.0
    %1472 = vmatpush1.msra.mxu0 %v1466
    %1473 = vmatprep.subr.mxu0 0.0
    %1474 = vmatpush1.msra.mxu0 0.0
    %1475 = vmatprep.subr.mxu0 0.0
    %1476 = vmatpush1.msra.mxu0 0.0
    %1477 = vmatprep.subr.mxu0 0.0
    %1478 = vmatpush1.msra.mxu0 0.0
    %1479 = vmatprep.subr.mxu0 0.0
    %1480 = vmatpush1.msra.mxu0 0.0
    %1481 = vmatprep.subr.mxu0 0.0
    %1482 = vmatpush1.msra.mxu0 0.0
    %1483 = vmatprep.subr.mxu0 0.0
    %1484 = vmatpush1.msra.mxu0 0.0
    %1485 = vmatprep.subr.mxu0 0.0
    %1486 = vmatpush1.msra.mxu0 0.0
    %1487 = vmatprep.subr.mxu0 0.0
    %1488 = vmatpush1.msra.mxu0 0.0
    %1489 = vmatprep.subr.mxu0 0.0
    %1490 = vmatpush1.msra.mxu0 0.0
    %1491 = vmatprep.subr.mxu0 0.0
    %1492 = vmatpush1.msra.mxu0 0.0
    %1493 = vmatprep.subr.mxu0 0.0
    %1494 = vmatpush1.msra.mxu0 0.0
    %1495 = vmatprep.subr.mxu0 0.0
    %1496 = vmatpush1.msra.mxu0 0.0
    %1497 = vmatprep.subr.mxu0 0.0
    %1498 = vmatpush1.msra.mxu0 0.0
    %1499 = vmatprep.subr.mxu0 0.0
    %1500 = vmatpush1.msra.mxu0 0.0
    %1501 = vmatprep.subr.mxu0 0.0
    %1502 = vmatpush1.msra.mxu0 0.0
    %1503 = vmatprep.subr.mxu0 0.0
    %1504 = vmatpush1.msra.mxu0 0.0
    %1505 = vmatprep.subr.mxu0 0.0
    %1506 = vmatpush1.msra.mxu0 0.0
    %1507 = vmatprep.subr.mxu0 0.0
    %1508 = vmatpush1.msra.mxu0 0.0
    %1509 = vmatprep.subr.mxu0 0.0
    %1510 = vmatpush1.msra.mxu0 0.0
    %1511 = vmatprep.subr.mxu0 0.0
    %1512 = vmatpush1.msra.mxu0 0.0
    %1513 = vmatprep.subr.mxu0 0.0
    %1514 = vmatpush1.msra.mxu0 0.0
    %1515 = vmatprep.subr.mxu0 0.0
    %1516 = vmatpush1.msra.mxu0 0.0
    %1517 = vmatprep.subr.mxu0 0.0
    %1518 = vmatpush1.msra.mxu0 0.0
    %1519 = vmatprep.subr.mxu0 0.0
    %1520 = vmatpush1.msra.mxu0 0.0
    %1521 = vmatprep.subr.mxu0 0.0
    %1522 = vmatpush1.msra.mxu0 0.0
    %1523 = vmatprep.subr.mxu0 0.0
    %1524 = vmatpush1.msra.mxu0 0.0
    %1525 = vmatprep.subr.mxu0 0.0
    %1526 = vmatpush1.msra.mxu0 0.0
    %1527 = vmatprep.subr.mxu0 0.0
    %1528 = vmatpush1.msra.mxu0 0.0
    %1529 = vmatprep.subr.mxu0 0.0
    %1530 = vmatpush1.msra.mxu0 0.0
    %1531 = vmatprep.subr.mxu0 0.0
    %1532 = vmatpush1.msra.mxu0 0.0
    %1533 = vmatprep.subr.mxu0 0.0
    %1534 = vmatpush1.msra.mxu0 0.0
    %1535 = vmatprep.mubr.f32.mxu0 0.0
    %1536 = vmatmul.mubr.f32.gmra.mrb[0].mxu0 %v1469
    %v1537 = vpop.f32.mrb[0].mxu0
    %v1538 = vadd.f32 0.0, %v1537
    %v1539 = vpop.f32.mrb[0].mxu0
    %1540 = vdwg.mxu0
    %1543 = vrot.lane.b32.xlu0 %v1462, 24
    %v1544 = vpop.permute.xlu0 %1543
    %1545 = vrot.lane.b32.xlu0 %v1538, 24
    %v1546 = vpop.permute.xlu0 %1545
    %vm1549 = vcmask 261312
    %1550 = vst.msk [vmem:[#allocation2] sm:$0xff] %vm1549, %v1544
    %1551 = vst.msk [vmem:[#allocation2 + $0x8] sm:$0xff] %vm1549, %v1546
    %v1552 = vld [vmem:[#allocation2] sm:$0xff]
    %v1553 = vld [vmem:[#allocation2 + $0x8] sm:$0xff]
    %v1554 = vld [vmem:[%s4] sm:$0xff]
    %v1555 = vld [vmem:[%s4 + $0x8] sm:$0xff]
    %v1556 = vld [vmem:[%s4 + $0x10] sm:$0xff]
    %v1557 = vld [vmem:[%s4 + $0x18] sm:$0xff]
    %v1558 = vld [vmem:[#allocation8] sm:$0x1]
    %v1560 = vlaneseq
    %v1561 = vshrl.u32 %v1560, 7
    %v1562 = vsub.s32 0, %v1561
    %v1563 = vrot.slane %v1558, %v1562
    %v1566 = vsel %vm95, %v1552, 0
    %v1569 = vsel %vm95, %v1553, 0
    %1571 = vmatprep.subr.mxu0 0.0
    %1572 = vmatpush1.msra.mxu0 %v1554
    %1573 = vmatprep.subr.mxu0 0.0
    %1574 = vmatpush1.msra.mxu0 %v1555
    %1575 = vmatprep.subr.mxu0 0.0
    %1576 = vmatpush1.msra.mxu0 %v1556
    %1577 = vmatprep.subr.mxu0 0.0
    %1578 = vmatpush1.msra.mxu0 %v1557
    %1579 = vmatprep.subr.mxu0 0.0
    %1580 = vmatpush1.msra.mxu0 0.0
    %1581 = vmatprep.subr.mxu0 0.0
    %1582 = vmatpush1.msra.mxu0 0.0
    %1583 = vmatprep.subr.mxu0 0.0
    %1584 = vmatpush1.msra.mxu0 0.0
    %1585 = vmatprep.subr.mxu0 0.0
    %1586 = vmatpush1.msra.mxu0 0.0
    %1587 = vmatprep.subr.mxu0 0.0
    %1588 = vmatpush1.msra.mxu0 0.0
    %1589 = vmatprep.subr.mxu0 0.0
    %1590 = vmatpush1.msra.mxu0 0.0
    %1591 = vmatprep.subr.mxu0 0.0
    %1592 = vmatpush1.msra.mxu0 0.0
    %1593 = vmatprep.subr.mxu0 0.0
    %1594 = vmatpush1.msra.mxu0 0.0
    %1595 = vmatprep.subr.mxu0 0.0
    %1596 = vmatpush1.msra.mxu0 0.0
    %1597 = vmatprep.subr.mxu0 0.0
    %1598 = vmatpush1.msra.mxu0 0.0
    %1599 = vmatprep.subr.mxu0 0.0
    %1600 = vmatpush1.msra.mxu0 0.0
    %1601 = vmatprep.subr.mxu0 0.0
    %1602 = vmatpush1.msra.mxu0 0.0
    %1603 = vmatprep.subr.mxu0 0.0
    %1604 = vmatpush1.msra.mxu0 0.0
    %1605 = vmatprep.subr.mxu0 0.0
    %1606 = vmatpush1.msra.mxu0 0.0
    %1607 = vmatprep.subr.mxu0 0.0
    %1608 = vmatpush1.msra.mxu0 0.0
    %1609 = vmatprep.subr.mxu0 0.0
    %1610 = vmatpush1.msra.mxu0 0.0
    %1611 = vmatprep.subr.mxu0 0.0
    %1612 = vmatpush1.msra.mxu0 0.0
    %1613 = vmatprep.subr.mxu0 0.0
    %1614 = vmatpush1.msra.mxu0 0.0
    %1615 = vmatprep.subr.mxu0 0.0
    %1616 = vmatpush1.msra.mxu0 0.0
    %1617 = vmatprep.subr.mxu0 0.0
    %1618 = vmatpush1.msra.mxu0 0.0
    %1619 = vmatprep.subr.mxu0 0.0
    %1620 = vmatpush1.msra.mxu0 0.0
    %1621 = vmatprep.subr.mxu0 0.0
    %1622 = vmatpush1.msra.mxu0 0.0
    %1623 = vmatprep.subr.mxu0 0.0
    %1624 = vmatpush1.msra.mxu0 0.0
    %1625 = vmatprep.subr.mxu0 0.0
    %1626 = vmatpush1.msra.mxu0 0.0
    %1627 = vmatprep.subr.mxu0 0.0
    %1628 = vmatpush1.msra.mxu0 0.0
    %1629 = vmatprep.subr.mxu0 0.0
    %1630 = vmatpush1.msra.mxu0 0.0
    %1631 = vmatprep.subr.mxu0 0.0
    %1632 = vmatpush1.msra.mxu0 0.0
    %1633 = vmatprep.subr.mxu0 0.0
    %1634 = vmatpush1.msra.mxu0 0.0
    %1635 = vmatprep.mubr.f32.mxu0 0.0
    %1636 = vmatmul.mubr.f32.gmra.mrb[0].mxu0 %v1566
    %v1637 = vpop.f32.mrb[0].mxu0
    %v1638 = vadd.f32 %v1563, %v1637
    %v1639 = vpop.f32.mrb[0].mxu0
    %1640 = vmatprep.mubr.f32.mxu0 0.0
    %1641 = vmatmul.mubr.f32.gmra.mrb[0].mxu0 %v1569
    %v1642 = vpop.f32.mrb[0].mxu0
    %v1643 = vadd.f32 %v1563, %v1642
    %v1644 = vpop.f32.mrb[0].mxu0
    %1645 = vdwg.mxu0
    %v1646 = vld [vmem:[%s6] sm:$0x1]
    %v1647 = vld [vmem:[%s7] sm:$0x1]
    %v1648 = vsel %vm95, %v1638, 0.0
    %1649 = vadd.xlane.f32.xlu0 %v1648
    %v1650 = vpop.xlane.xlu0 %1649
    %v1651 = vsel %vm95, %v1643, 0.0
    %1652 = vadd.xlane.f32.xlu0 %v1651
    %v1653 = vpop.xlane.xlu0 %1652
    %v1654 = vrcp.pop 32.0
    %v1655 = vmul.f32 %v1650, %v1654
    %v1656 = vmul.f32 %v1653, %v1654
    %v1657 = vsub.f32 %v1638, %v1655
    %v1658 = vsub.f32 %v1643, %v1656
    %v1659 = vmul.f32 %v1657, %v1657
    %v1660 = vmul.f32 %v1658, %v1658
    %v1661 = vsel %vm95, %v1659, 0.0
    %1662 = vadd.xlane.f32.xlu0 %v1661
    %v1663 = vpop.xlane.xlu0 %1662
    %v1664 = vsel %vm95, %v1660, 0.0
    %1665 = vadd.xlane.f32.xlu0 %v1664
    %v1666 = vpop.xlane.xlu0 %1665
    %v1667 = vrcp.pop 31.0
    %v1668 = vmul.f32 %v1663, %v1667
    %v1669 = vmul.f32 %v1666, %v1667
    %v1670 = vlaneseq
    %v1671 = vshrl.u32 %v1670, 7
    %v1672 = vsub.s32 0, %v1671
    %v1673 = vrot.slane %v1646, %v1672
    %v1674 = vmul.f32 %v1673, %v1657
    %v1675 = vmul.f32 %v1673, %v1658
    %v1676 = vrsqrt.pop %v1668
    %v1677 = vmul.f32 %v1668, %v1676
    %vm1678 = vcmp.eq.f32.partialorder %v1668, inf
    %v1679 = vsel %vm1678, %v1668, %v1677
    %vm1680 = vcmp.eq.f32.partialorder %v1668, 0.0
    %v1681 = vand.u32 %v1668, 2147483648
    %v1682 = vsel %vm1680, %v1681, %v1679
    %v1683 = vrsqrt.pop %v1669
    %v1684 = vmul.f32 %v1669, %v1683
    %vm1685 = vcmp.eq.f32.partialorder %v1669, inf
    %v1686 = vsel %vm1685, %v1669, %v1684
    %vm1687 = vcmp.eq.f32.partialorder %v1669, 0.0
    %v1688 = vand.u32 %v1669, 2147483648
    %v1689 = vsel %vm1687, %v1688, %v1686
    %v1690 = vadd.f32 %v1682, 1e-06
    %v1691 = vadd.f32 %v1689, 1e-06
    %v1692 = vrcp.pop %v1690
    %v1693 = vmul.f32 %v1674, %v1692
    %v1694 = vrcp.pop %v1691
    %v1695 = vmul.f32 %v1675, %v1694
    %v1696 = vlaneseq
    %v1697 = vshrl.u32 %v1696, 7
    %v1698 = vsub.s32 0, %v1697
    %v1699 = vrot.slane %v1647, %v1698
    %v1700 = vadd.f32 %v1693, %v1699
    %v1701 = vadd.f32 %v1695, %v1699
    %v1702 = vadd.f32 %v82, %v1700
    %v1703 = vadd.f32 %v83, %v1701
    %v1704 = vld [vmem:[%s8] sm:$0xff]
    %v1705 = vld [vmem:[%s8 + $0x8] sm:$0xff]
    %v1706 = vld [vmem:[%s8 + $0x10] sm:$0xff]
    %v1707 = vld [vmem:[%s8 + $0x18] sm:$0xff]
    %v1708 = vld [vmem:[#allocation10] sm:$0x1]
    %v1710 = vlaneseq
    %v1711 = vshrl.u32 %v1710, 7
    %v1712 = vsub.s32 0, %v1711
    %v1713 = vrot.slane %v1708, %v1712
    %v1716 = vsel %vm95, %v1702, 0
    %v1719 = vsel %vm95, %v1703, 0
    %1721 = vmatprep.subr.mxu0 0.0
    %1722 = vmatpush1.msra.mxu0 %v1704
    %1723 = vmatprep.subr.mxu0 0.0
    %1724 = vmatpush1.msra.mxu0 %v1705
    %1725 = vmatprep.subr.mxu0 0.0
    %1726 = vmatpush1.msra.mxu0 %v1706
    %1727 = vmatprep.subr.mxu0 0.0
    %1728 = vmatpush1.msra.mxu0 %v1707
    %1729 = vmatprep.subr.mxu0 0.0
    %1730 = vmatpush1.msra.mxu0 0.0
    %1731 = vmatprep.subr.mxu0 0.0
    %1732 = vmatpush1.msra.mxu0 0.0
    %1733 = vmatprep.subr.mxu0 0.0
    %1734 = vmatpush1.msra.mxu0 0.0
    %1735 = vmatprep.subr.mxu0 0.0
    %1736 = vmatpush1.msra.mxu0 0.0
    %1737 = vmatprep.subr.mxu0 0.0
    %1738 = vmatpush1.msra.mxu0 0.0
    %1739 = vmatprep.subr.mxu0 0.0
    %1740 = vmatpush1.msra.mxu0 0.0
    %1741 = vmatprep.subr.mxu0 0.0
    %1742 = vmatpush1.msra.mxu0 0.0
    %1743 = vmatprep.subr.mxu0 0.0
    %1744 = vmatpush1.msra.mxu0 0.0
    %1745 = vmatprep.subr.mxu0 0.0
    %1746 = vmatpush1.msra.mxu0 0.0
    %1747 = vmatprep.subr.mxu0 0.0
    %1748 = vmatpush1.msra.mxu0 0.0
    %1749 = vmatprep.subr.mxu0 0.0
    %1750 = vmatpush1.msra.mxu0 0.0
    %1751 = vmatprep.subr.mxu0 0.0
    %1752 = vmatpush1.msra.mxu0 0.0
    %1753 = vmatprep.subr.mxu0 0.0
    %1754 = vmatpush1.msra.mxu0 0.0
    %1755 = vmatprep.subr.mxu0 0.0
    %1756 = vmatpush1.msra.mxu0 0.0
    %1757 = vmatprep.subr.mxu0 0.0
    %1758 = vmatpush1.msra.mxu0 0.0
    %1759 = vmatprep.subr.mxu0 0.0
    %1760 = vmatpush1.msra.mxu0 0.0
    %1761 = vmatprep.subr.mxu0 0.0
    %1762 = vmatpush1.msra.mxu0 0.0
    %1763 = vmatprep.subr.mxu0 0.0
    %1764 = vmatpush1.msra.mxu0 0.0
    %1765 = vmatprep.subr.mxu0 0.0
    %1766 = vmatpush1.msra.mxu0 0.0
    %1767 = vmatprep.subr.mxu0 0.0
    %1768 = vmatpush1.msra.mxu0 0.0
    %1769 = vmatprep.subr.mxu0 0.0
    %1770 = vmatpush1.msra.mxu0 0.0
    %1771 = vmatprep.subr.mxu0 0.0
    %1772 = vmatpush1.msra.mxu0 0.0
    %1773 = vmatprep.subr.mxu0 0.0
    %1774 = vmatpush1.msra.mxu0 0.0
    %1775 = vmatprep.subr.mxu0 0.0
    %1776 = vmatpush1.msra.mxu0 0.0
    %1777 = vmatprep.subr.mxu0 0.0
    %1778 = vmatpush1.msra.mxu0 0.0
    %1779 = vmatprep.subr.mxu0 0.0
    %1780 = vmatpush1.msra.mxu0 0.0
    %1781 = vmatprep.subr.mxu0 0.0
    %1782 = vmatpush1.msra.mxu0 0.0
    %1783 = vmatprep.subr.mxu0 0.0
    %1784 = vmatpush1.msra.mxu0 0.0
    %1785 = vmatprep.mubr.f32.mxu0 0.0
    %1786 = vmatmul.mubr.f32.gmra.mrb[0].mxu0 %v1716
    %v1787 = vpop.f32.mrb[0].mxu0
    %v1788 = vadd.f32 %v1713, %v1787
    %v1789 = vpop.f32.mrb[0].mxu0
    %1790 = vmatprep.mubr.f32.mxu0 0.0
    %1791 = vmatmul.mubr.f32.gmra.mrb[0].mxu0 %v1719
    %v1792 = vpop.f32.mrb[0].mxu0
    %v1793 = vadd.f32 %v1713, %v1792
    %v1794 = vpop.f32.mrb[0].mxu0
    %1795 = vdwg.mxu0
    %v1796 = vmax.f32 %v1788, 0.0
    %v1797 = vmax.f32 %v1793, 0.0
    %v1798 = vld [vmem:[%s10] sm:$0xff]
    %v1799 = vld [vmem:[%s10 + $0x8] sm:$0xff]
    %v1800 = vld [vmem:[%s10 + $0x10] sm:$0xff]
    %v1801 = vld [vmem:[%s10 + $0x18] sm:$0xff]
    %v1802 = vld [vmem:[%s10 + $0x20] sm:$0xff]
    %v1803 = vld [vmem:[%s10 + $0x28] sm:$0xff]
    %v1804 = vld [vmem:[%s10 + $0x30] sm:$0xff]
    %v1805 = vld [vmem:[%s10 + $0x38] sm:$0xff]
    %v1806 = vld [vmem:[%s11] sm:$0x1]
    %v1808 = vlaneseq
    %v1809 = vshrl.u32 %v1808, 7
    %v1810 = vsub.s32 0, %v1809
    %v1811 = vrot.slane %v1806, %v1810
    %vm1813 = vcmask 523264
    %v1815 = vsel %vm1813, %v1796, 0
    %v1818 = vsel %vm1813, %v1797, 0
    %1820 = vmatprep.subr.mxu0 0.0
    %1821 = vmatpush1.msra.mxu0 %v1798
    %1822 = vmatprep.subr.mxu0 0.0
    %1823 = vmatpush1.msra.mxu0 %v1799
    %1824 = vmatprep.subr.mxu0 0.0
    %1825 = vmatpush1.msra.mxu0 %v1800
    %1826 = vmatprep.subr.mxu0 0.0
    %1827 = vmatpush1.msra.mxu0 %v1801
    %1828 = vmatprep.subr.mxu0 0.0
    %1829 = vmatpush1.msra.mxu0 %v1802
    %1830 = vmatprep.subr.mxu0 0.0
    %1831 = vmatpush1.msra.mxu0 %v1803
    %1832 = vmatprep.subr.mxu0 0.0
    %1833 = vmatpush1.msra.mxu0 %v1804
    %1834 = vmatprep.subr.mxu0 0.0
    %1835 = vmatpush1.msra.mxu0 %v1805
    %1836 = vmatprep.subr.mxu0 0.0
    %1837 = vmatpush1.msra.mxu0 0.0
    %1838 = vmatprep.subr.mxu0 0.0
    %1839 = vmatpush1.msra.mxu0 0.0
    %1840 = vmatprep.subr.mxu0 0.0
    %1841 = vmatpush1.msra.mxu0 0.0
    %1842 = vmatprep.subr.mxu0 0.0
    %1843 = vmatpush1.msra.mxu0 0.0
    %1844 = vmatprep.subr.mxu0 0.0
    %1845 = vmatpush1.msra.mxu0 0.0
    %1846 = vmatprep.subr.mxu0 0.0
    %1847 = vmatpush1.msra.mxu0 0.0
    %1848 = vmatprep.subr.mxu0 0.0
    %1849 = vmatpush1.msra.mxu0 0.0
    %1850 = vmatprep.subr.mxu0 0.0
    %1851 = vmatpush1.msra.mxu0 0.0
    %1852 = vmatprep.subr.mxu0 0.0
    %1853 = vmatpush1.msra.mxu0 0.0
    %1854 = vmatprep.subr.mxu0 0.0
    %1855 = vmatpush1.msra.mxu0 0.0
    %1856 = vmatprep.subr.mxu0 0.0
    %1857 = vmatpush1.msra.mxu0 0.0
    %1858 = vmatprep.subr.mxu0 0.0
    %1859 = vmatpush1.msra.mxu0 0.0
    %1860 = vmatprep.subr.mxu0 0.0
    %1861 = vmatpush1.msra.mxu0 0.0
    %1862 = vmatprep.subr.mxu0 0.0
    %1863 = vmatpush1.msra.mxu0 0.0
    %1864 = vmatprep.subr.mxu0 0.0
    %1865 = vmatpush1.msra.mxu0 0.0
    %1866 = vmatprep.subr.mxu0 0.0
    %1867 = vmatpush1.msra.mxu0 0.0
    %1868 = vmatprep.subr.mxu0 0.0
    %1869 = vmatpush1.msra.mxu0 0.0
    %1870 = vmatprep.subr.mxu0 0.0
    %1871 = vmatpush1.msra.mxu0 0.0
    %1872 = vmatprep.subr.mxu0 0.0
    %1873 = vmatpush1.msra.mxu0 0.0
    %1874 = vmatprep.subr.mxu0 0.0
    %1875 = vmatpush1.msra.mxu0 0.0
    %1876 = vmatprep.subr.mxu0 0.0
    %1877 = vmatpush1.msra.mxu0 0.0
    %1878 = vmatprep.subr.mxu0 0.0
    %1879 = vmatpush1.msra.mxu0 0.0
    %1880 = vmatprep.subr.mxu0 0.0
    %1881 = vmatpush1.msra.mxu0 0.0
    %1882 = vmatprep.subr.mxu0 0.0
    %1883 = vmatpush1.msra.mxu0 0.0
    %1884 = vmatprep.mubr.f32.mxu0 0.0
    %1885 = vmatmul.mubr.f32.gmra.mrb[0].mxu0 %v1815
    %v1886 = vpop.f32.mrb[0].mxu0
    %v1887 = vadd.f32 %v1811, %v1886
    %v1888 = vpop.f32.mrb[0].mxu0
    %1889 = vmatprep.mubr.f32.mxu0 0.0
    %1890 = vmatmul.mubr.f32.gmra.mrb[0].mxu0 %v1818
    %v1891 = vpop.f32.mrb[0].mxu0
    %v1892 = vadd.f32 %v1811, %v1891
    %v1893 = vpop.f32.mrb[0].mxu0
    %1894 = vdwg.mxu0
    %v1895 = vld [vmem:[%s6 + $0x1] sm:$0x1]
    %v1896 = vld [vmem:[%s7 + $0x1] sm:$0x1]
    %v1897 = vsel %vm95, %v1887, 0.0
    %1898 = vadd.xlane.f32.xlu0 %v1897
    %v1899 = vpop.xlane.xlu0 %1898
    %v1900 = vsel %vm95, %v1892, 0.0
    %1901 = vadd.xlane.f32.xlu0 %v1900
    %v1902 = vpop.xlane.xlu0 %1901
    %v1903 = vmul.f32 %v1899, %v1654
    %v1904 = vmul.f32 %v1902, %v1654
    %v1905 = vsub.f32 %v1887, %v1903
    %v1906 = vsub.f32 %v1892, %v1904
    %v1907 = vmul.f32 %v1905, %v1905
    %v1908 = vmul.f32 %v1906, %v1906
    %v1909 = vsel %vm95, %v1907, 0.0
    %1910 = vadd.xlane.f32.xlu0 %v1909
    %v1911 = vpop.xlane.xlu0 %1910
    %v1912 = vsel %vm95, %v1908, 0.0
    %1913 = vadd.xlane.f32.xlu0 %v1912
    %v1914 = vpop.xlane.xlu0 %1913
    %v1915 = vmul.f32 %v1911, %v1667
    %v1916 = vmul.f32 %v1914, %v1667
    %v1917 = vlaneseq
    %v1918 = vshrl.u32 %v1917, 7
    %v1919 = vsub.s32 0, %v1918
    %v1920 = vrot.slane %v1895, %v1919
    %v1921 = vmul.f32 %v1920, %v1905
    %v1922 = vmul.f32 %v1920, %v1906
    %v1923 = vrsqrt.pop %v1915
    %v1924 = vmul.f32 %v1915, %v1923
    %vm1925 = vcmp.eq.f32.partialorder %v1915, inf
    %v1926 = vsel %vm1925, %v1915, %v1924
    %vm1927 = vcmp.eq.f32.partialorder %v1915, 0.0
    %v1928 = vand.u32 %v1915, 2147483648
    %v1929 = vsel %vm1927, %v1928, %v1926
    %v1930 = vrsqrt.pop %v1916
    %v1931 = vmul.f32 %v1916, %v1930
    %vm1932 = vcmp.eq.f32.partialorder %v1916, inf
    %v1933 = vsel %vm1932, %v1916, %v1931
    %vm1934 = vcmp.eq.f32.partialorder %v1916, 0.0
    %v1935 = vand.u32 %v1916, 2147483648
    %v1936 = vsel %vm1934, %v1935, %v1933
    %v1937 = vadd.f32 %v1929, 1e-06
    %v1938 = vadd.f32 %v1936, 1e-06
    %v1939 = vrcp.pop %v1937
    %v1940 = vmul.f32 %v1921, %v1939
    %v1941 = vrcp.pop %v1938
    %v1942 = vmul.f32 %v1922, %v1941
    %v1943 = vlaneseq
    %v1944 = vshrl.u32 %v1943, 7
    %v1945 = vsub.s32 0, %v1944
    %v1946 = vrot.slane %v1896, %v1945
    %v1947 = vadd.f32 %v1940, %v1946
    %v1948 = vadd.f32 %v1942, %v1946
    %v1949 = vadd.f32 %v1702, %v1947
    %v1950 = vadd.f32 %v1703, %v1948
    %1951 = vst.msk [vmem:[#allocation11] sm:$0xff] %vm95, %v1949
    %1952 = vst.msk [vmem:[#allocation11 + $0x8] sm:$0xff] %vm95, %v1950
    // Predicated region
    $region58: #{tpu_custom_call.1} parent=1 // pred_check
      _
    $region59: #{tpu_custom_call.1} parent=1 // pred_check_branch
      %1954 = sbr.rel (0) target = $region61
    $region60: #{tpu_custom_call.1} parent=1 // pred_region
      %s1956 = ssub.s32 256, 256
      %1957 = vsyncadd [#allocation7], %s1956
      %s1958 = sshll.u32 [#allocation11], 4
      %s1959 = int_to_ptr.vmem [resolvable:$true] %s1958
      %1964 = dma.vmem_to_hbm [thread:$0]  %s1959, 256, %s12, [#allocation7], 128, 128, 8
    $region61: #{tpu_custom_call.1} parent=1 // pred_fallthru
      _
    // Predicated region
    $region62: #{tpu_custom_call.1} parent=1 // pred_check
      _
    $region63: #{tpu_custom_call.1} parent=1 // pred_check_branch
      %1966 = sbr.rel (0) target = $region65
    $region64: #{tpu_custom_call.1} parent=1 // pred_region
      %1967 = dma.done [#allocation7], 256
    $region65: #{tpu_custom_call.1} parent=1 // pred_fallthru
      _
    %1968 = vsyncpa [#allocation6], 1
    %1969 = vsyncpa [#allocation9], 1
    %1970 = vsyncpa [#allocation7], 1

</llo_original>
